<compile_context>
chip_gen: v6e
topology: v6e:2x2x1
jax: 0.10.0
libtpu: 0.0.40
codegen_flags: <defaults>
</compile_context>

<pallas_src>
import functools

import jax
import jax.numpy as jnp
from jax.experimental import pallas as pl
from jax.experimental.pallas import tpu as pltpu


def _bow_embedding_kernel(idx_ref, embt_ref, out_ref, *, max_value, batch_block):
    # idx_ref : (Bblk, 3, TP) int32 raw channel values in [0, max_value)
    # embt_ref: (3, D, max_value) float32 per-channel transposed embedding table
    # out_ref : (Bblk, D, TP) float32
    mv = max_value
    tp = idx_ref.shape[-1]

    # Per-channel table slices, loaded once (resident across the unrolled batch loop).
    e0 = embt_ref[0]                                    # (D, mv)
    e1 = embt_ref[1]
    e2 = embt_ref[2]

    # Shared iota, hoisted out of the batch loop (JAX does not CSE broadcasts).
    iota_v = jax.lax.broadcasted_iota(jnp.int32, (mv, tp), 0)   # (mv, TP)

    dot = functools.partial(jnp.dot,
                            preferred_element_type=jnp.float32,
                            precision=jax.lax.Precision.HIGHEST)

    for b in range(batch_block):                        # static unroll (Bblk <= 8)
        idx = idx_ref[b]                                # (3, TP)
        # One-hot per channel (single compare + single cast each; no offset adds).
        oh0 = (idx[0:1, :] == iota_v).astype(jnp.float32)       # (mv, TP)
        oh1 = (idx[1:2, :] == iota_v).astype(jnp.float32)
        oh2 = (idx[2:3, :] == iota_v).astype(jnp.float32)
        # Gather + channel-sum fused as three accumulated MXU matmuls -> (D, TP).
        acc = dot(e0, oh0)
        acc += dot(e1, oh1)
        acc += dot(e2, oh2)
        out_ref[b] = acc                                # lane-dense full store


def _pick_batch_block(batch):
    """Largest divisor of `batch` that is <= 8 while keeping >= 2 grid steps."""
    best = 1
    for d in range(1, min(8, batch) + 1):
        if batch % d == 0 and (batch // d >= 2 or batch == 1):
            best = d
    return best


def image_bow_embedding(inputs, emb_weight, max_value, *, tile_pixels=2048):
    """inputs: (B, 3, H, W) integer-valued; emb_weight: (3*max_value, D).

    Returns (B, D, H, W) float32, matching the PyTorch module.
    """
    B, C, H, W = inputs.shape
    assert C == 3, "ImageBOWEmbedding expects 3 channels (offsets has length 3)"
    V, D = emb_weight.shape
    assert V == 3 * max_value

    HW = H * W
    # Channel-major, pixel-last layout -- this reshape is layout-free for NCHW.
    idx = inputs.astype(jnp.int32).reshape(B, 3, HW)

    # Pad pixels only to a multiple of 128 (pad <= 127), then pick the pixel tile as
    # the largest lane-dense divisor of the padded pixel count that fits tile_pixels.
    HWp = ((HW + 127) // 128) * 128
    pad = HWp - HW
    if pad:
        idx = jnp.pad(idx, ((0, 0), (0, 0), (0, pad)))  # padded cols use idx=0; sliced off below
    m = HWp // 128
    d_max = max(1, min(m, tile_pixels // 128))
    d = 1
    for cand in range(d_max, 0, -1):
        if m % cand == 0:
            d = cand
            break
    tile = 128 * d

    # Batch-block small images so each grid step moves enough data to amortize the
    # ~0.35 us per-step overhead; keep >= 2 steps so both v7x TensorCores get work.
    bblk = _pick_batch_block(B) if HWp <= 1024 else 1

    # Per-channel transposed table: (3, D, max_value).  Tiny, computed once, resident
    # in VMEM across all grid steps; avoids lane-offset slicing inside the kernel.
    emb_t = emb_weight.astype(jnp.float32).reshape(3, max_value, D).transpose(0, 2, 1)

    kernel = functools.partial(_bow_embedding_kernel,
                               max_value=max_value, batch_block=bblk)

    out = pl.pallas_call(
        kernel,
        out_shape=jax.ShapeDtypeStruct((B, D, HWp), jnp.float32),
        grid=(B // bblk, HWp // tile),
        in_specs=[
            pl.BlockSpec((bblk, 3, tile), lambda bb, t: (bb, 0, t)),
            # Full (3, D, max_value) table every step (stays resident in VMEM).
            pl.BlockSpec((3, D, max_value), lambda bb, t: (0, 0, 0)),
        ],
        out_specs=pl.BlockSpec((bblk, D, tile), lambda bb, t: (bb, 0, t)),
        compiler_params=pltpu.CompilerParams(
            dimension_semantics=("parallel", "parallel")),
    )(idx, emb_t)

    if pad:
        # Only hit when H*W is not a multiple of 128 (<=127 wasted columns per image).
        out = out[:, :, :HW]
    return out.reshape(B, D, H, W)                      # free reshape to NCHW


def _reference(inputs, emb_weight, max_value):
    offsets = jnp.array([0, max_value, 2 * max_value], dtype=jnp.int32)
    idx = inputs.astype(jnp.int32) + offsets[None, :, None, None]     # (B, 3, H, W)
    emb = jnp.take(emb_weight, idx, axis=0)                           # (B, 3, H, W, D)
    return jnp.transpose(emb.sum(axis=1), (0, 3, 1, 2))               # (B, D, H, W)


if __name__ == "__main__":
    key = jax.random.PRNGKey(0)
    k_in, k_emb, k_in2, k_emb2 = jax.random.split(key, 4)

    # Case 1: B=2, 16x16 image (pixel count is a multiple of 128 -> no pad, no slice).
    B, H, W = 2, 16, 16
    max_value, embedding_dim = 8, 32
    inputs = jax.random.randint(k_in, (B, 3, H, W), 0, max_value, dtype=jnp.int32)
    emb_weight = jax.random.normal(k_emb, (3 * max_value, embedding_dim),
                                   dtype=jnp.float32)
    out = jax.block_until_ready(image_bow_embedding(inputs, emb_weight, max_value))
    ref = _reference(inputs, emb_weight, max_value)
    assert out.shape == (B, embedding_dim, H, W), out.shape
    assert jnp.allclose(out, ref, atol=1e-5, rtol=1e-5), "mismatch vs reference (case 1)"

    # Case 2: B=8, 7x7 image -- exercises batch blocking (Bblk=4) and the ragged
    # 49 -> 128 pixel padding path.
    B2, H2, W2 = 8, 7, 7
    mv2, D2 = 11, 16
    inputs2 = jax.random.randint(k_in2, (B2, 3, H2, W2), 0, mv2, dtype=jnp.int32)
    emb_weight2 = jax.random.normal(k_emb2, (3 * mv2, D2), dtype=jnp.float32)
    out2 = jax.block_until_ready(image_bow_embedding(inputs2, emb_weight2, mv2))
    ref2 = _reference(inputs2, emb_weight2, mv2)
    assert out2.shape == (B2, D2, H2, W2), out2.shape
    assert jnp.allclose(out2, ref2, atol=1e-5, rtol=1e-5), "mismatch vs reference (case 2)"

    print("KERNEL_OK")
</pallas_src>

<mosaic_0001>
module attributes {stable_mosaic.version = 11 : i64} {
  func.func @_bow_embedding_kernel(%arg0: i32, %arg1: i32, %arg2: memref<1x3x256xi32, #tpu.memory_space<vmem>>, %arg3: memref<3x32x8xf32, #tpu.memory_space<vmem>>, %arg4: memref<1x32x256xf32, #tpu.memory_space<vmem>>) attributes {dimension_semantics = [#tpu.dimension_semantics<parallel>, #tpu.dimension_semantics<parallel>], iteration_bounds = array<i64: 2, 1>, scalar_prefetch = 0 : i64, scratch_operands = 0 : i64, tpu.core_type = #tpu.core_type<tc>, window_params = [{transform_indices = @transform_0, window_bounds = array<i64: 1, 3, 256>}, {pipeline_mode = #tpu.pipeline_mode<synchronous>, transform_indices = @transform_1, window_bounds = array<i64: 3, 32, 8>}, {transform_indices = @transform_2, window_bounds = array<i64: 1, 32, 256>}]} {
    %c0 = arith.constant 0 : index
    %c0_0 = arith.constant 0 : index
    %c0_1 = arith.constant 0 : index
    %0 = vector.load %arg3[%c0, %c0_0, %c0_1] : memref<3x32x8xf32, #tpu.memory_space<vmem>>, vector<1x32x8xf32>
    %1 = vector.shape_cast %0 : vector<1x32x8xf32> to vector<32x8xf32>
    %c1 = arith.constant 1 : index
    %c0_2 = arith.constant 0 : index
    %c0_3 = arith.constant 0 : index
    %2 = vector.load %arg3[%c1, %c0_2, %c0_3] : memref<3x32x8xf32, #tpu.memory_space<vmem>>, vector<1x32x8xf32>
    %3 = vector.shape_cast %2 : vector<1x32x8xf32> to vector<32x8xf32>
    %c2 = arith.constant 2 : index
    %c0_4 = arith.constant 0 : index
    %c0_5 = arith.constant 0 : index
    %4 = vector.load %arg3[%c2, %c0_4, %c0_5] : memref<3x32x8xf32, #tpu.memory_space<vmem>>, vector<1x32x8xf32>
    %5 = vector.shape_cast %4 : vector<1x32x8xf32> to vector<32x8xf32>
    %6 = tpu.iota {dimensions = array<i32: 0>} : vector<8x256xi32>
    %c0_6 = arith.constant 0 : index
    %c0_7 = arith.constant 0 : index
    %c0_8 = arith.constant 0 : index
    %7 = vector.load %arg2[%c0_6, %c0_7, %c0_8] : memref<1x3x256xi32, #tpu.memory_space<vmem>>, vector<1x3x256xi32>
    %8 = vector.shape_cast %7 : vector<1x3x256xi32> to vector<3x256xi32>
    %9 = vector.extract_strided_slice %8 {offsets = [0, 0], sizes = [1, 256], strides = [1, 1]} : vector<3x256xi32> to vector<1x256xi32>
    %10 = vector.broadcast %9 : vector<1x256xi32> to vector<8x256xi32>
    %11 = arith.cmpi eq, %10, %6 : vector<8x256xi32>
    %12 = arith.extui %11 : vector<8x256xi1> to vector<8x256xi32>
    %13 = arith.sitofp %12 : vector<8x256xi32> to vector<8x256xf32>
    %14 = vector.extract_strided_slice %8 {offsets = [1, 0], sizes = [1, 256], strides = [1, 1]} : vector<3x256xi32> to vector<1x256xi32>
    %15 = vector.broadcast %14 : vector<1x256xi32> to vector<8x256xi32>
    %16 = arith.cmpi eq, %15, %6 : vector<8x256xi32>
    %17 = arith.extui %16 : vector<8x256xi1> to vector<8x256xi32>
    %18 = arith.sitofp %17 : vector<8x256xi32> to vector<8x256xf32>
    %19 = vector.extract_strided_slice %8 {offsets = [2, 0], sizes = [1, 256], strides = [1, 1]} : vector<3x256xi32> to vector<1x256xi32>
    %20 = vector.broadcast %19 : vector<1x256xi32> to vector<8x256xi32>
    %21 = arith.cmpi eq, %20, %6 : vector<8x256xi32>
    %22 = arith.extui %21 : vector<8x256xi1> to vector<8x256xi32>
    %23 = arith.sitofp %22 : vector<8x256xi32> to vector<8x256xf32>
    %cst = arith.constant dense<0.000000e+00> : vector<32x256xf32>
    %24 = tpu.matmul %1, %13, %cst {dimension_numbers = #tpu.dot_dimension_numbers<[1], [0], [0], [1], [0, 0, 1, 1], [], []>, precision = #tpu.contract_precision<fp32>} : vector<32x8xf32>, vector<8x256xf32>, vector<32x256xf32> -> vector<32x256xf32>
    %cst_9 = arith.constant dense<0.000000e+00> : vector<32x256xf32>
    %25 = tpu.matmul %3, %18, %cst_9 {dimension_numbers = #tpu.dot_dimension_numbers<[1], [0], [0], [1], [0, 0, 1, 1], [], []>, precision = #tpu.contract_precision<fp32>} : vector<32x8xf32>, vector<8x256xf32>, vector<32x256xf32> -> vector<32x256xf32>
    %26 = arith.addf %24, %25 : vector<32x256xf32>
    %cst_10 = arith.constant dense<0.000000e+00> : vector<32x256xf32>
    %27 = tpu.matmul %5, %23, %cst_10 {dimension_numbers = #tpu.dot_dimension_numbers<[1], [0], [0], [1], [0, 0, 1, 1], [], []>, precision = #tpu.contract_precision<fp32>} : vector<32x8xf32>, vector<8x256xf32>, vector<32x256xf32> -> vector<32x256xf32>
    %28 = arith.addf %26, %27 : vector<32x256xf32>
    %c0_11 = arith.constant 0 : index
    %c0_12 = arith.constant 0 : index
    %c0_13 = arith.constant 0 : index
    %29 = vector.load %arg4[%c0_11, %c0_12, %c0_13] : memref<1x32x256xf32, #tpu.memory_space<vmem>>, vector<1x32x256xf32>
    %30 = vector.shape_cast %29 : vector<1x32x256xf32> to vector<32x256xf32>
    %31 = vector.shape_cast %28 : vector<32x256xf32> to vector<1x32x256xf32>
    tpu.vector_store %arg4[%c0_11, %c0_12, %c0_13], %31 {strides = array<i32>} : memref<1x32x256xf32, #tpu.memory_space<vmem>>, vector<1x32x256xf32>,
    return
  }
  func.func @transform_0(%arg0: i32, %arg1: i32) -> (i32, i32, i32) {
    %c0_i32 = arith.constant 0 : i32
    %c0_i32_0 = arith.constant 0 : i32
    return %arg0, %c0_i32, %arg1 : i32, i32, i32
  }
  func.func @transform_1(%arg0: i32, %arg1: i32) -> (i32, i32, i32) {
    %c0_i32 = arith.constant 0 : i32
    %c0_i32_0 = arith.constant 0 : i32
    %c0_i32_1 = arith.constant 0 : i32
    %c0_i32_2 = arith.constant 0 : i32
    return %c0_i32, %c0_i32_0, %c0_i32_1 : i32, i32, i32
  }
  func.func @transform_2(%arg0: i32, %arg1: i32) -> (i32, i32, i32) {
    %c0_i32 = arith.constant 0 : i32
    %c0_i32_0 = arith.constant 0 : i32
    return %arg0, %c0_i32, %arg1 : i32, i32, i32
  }
}

</mosaic_0001>

<llo_original>
// kernel: tpu_custom_call.1
$region0: #{tpu_custom_call.1}
  #allocation0 [shape = 'u32[]', space=smem, size = 0x4, offset = 0x4, fixed_abs, tag = 'smem constant byte address 0x4 - core index']
  #allocation1 [shape = 'u32[144,128]{1,0:T(1,128)}', space=vmem, size = 0x12000, scoped, tag = 'internal scratch']
  %s0 = inlined_call_operand.vmem [shape: s32[2,3,256], index: 0, kind: input, shape index: {}]
  %s1 = inlined_call_operand.vmem [shape: f32[3,32,8], index: 1, kind: input, shape index: {}]
  %s2 = inlined_call_operand.hbm [shape: f32[2,32,256], index: 2, kind: output, shape index: {}]
  %s3 = sld [smem:[#allocation0]]
  $region41: #{tpu_custom_call.1} parent=0
    _
  %s5 = ssub.s32 1, %s3
  %s6 = scalar_select 0, %s5, %s3
  $region1: #{tpu_custom_call.1} parent=0
    #allocation2 [shape = 'u8[65536]{0}', space=vmem, size = 0x10000, scoped, tag = 'output window, operand 0']
    #allocation3 [shape = 's32[2]{0}', space=sflag, size = 0x8, scoped, tag = 'scoped memory for tpu_custom_call.1']
    %7 = vsyncpa [#allocation3], 0
    %s8 = scalar_lea.sflag [#allocation3], 1
    %9 = vsyncpa %s8, 0
    loop: start=0, step=1, limit=4
    $region2: #{tpu_custom_call.1} parent=1 // loop_pre_header
      _
    $region3: #{tpu_custom_call.1} parent=1 // loop_header
      %s11 = sphi 0, %s15
      %p12 = scmp.ge.s32.totalorder %s11, 4
      %s18 = sphi 0, %s30
      %s19 = sphi 0, %s26
      %s20 = sphi 0, %s18
      %s21 = sphi 0, %s19
      %s22 = sphi 0, %s20
      %s23 = sphi 0, %s21
      %s35 = sphi 0, %s37
      %s38 = sphi 0, %s35
      %s39 = sphi 0, %s38
      %s55 = sphi 0, %s39
      %s59 = sphi 0, %s59
      %s61 = sphi 0, %s59
      %s62 = sphi 0, %s61
      %s76 = sphi 0, %s62
      %s84 = sphi 0, %s86
      %s87 = sphi 0, %s84
      %s88 = sphi 0, %s87
      %s104 = sphi 0, %s88
    $region4: #{tpu_custom_call.1} parent=1 // loop_header_branch
      %14 = sbr.rel (%p12) target = $region8
    $region5: #{tpu_custom_call.1} parent=1 // loop_body
      %s16 = ssub.s32 %s11, 1
      %s17 = ssub.s32 %s11, 2
      %s24 = sadd.s32 1, %s19
      %p25 = scmp.ge.s32.totalorder %s24, 1
      %s26 = scalar_select %p25, 0, %s24
      %s27 = sadd.s32 1, %s18
      %s28 = scalar_select %p25, %s27, %s18
      %p29 = scmp.ge.s32.totalorder %s28, 2
      %s30 = scalar_select %p29, 0, %s28
      %s31 = ssub.s32 %s18, %s30
      %s32 = ssub.s32 %s19, %s26
      %s33 = sor.u32 %s31, %s32
      %p34 = scmp.eq.s32.totalorder %s33, 0
      %s36 = sadd.s32 %s35, 1
      %s37 = scalar_select %p34, %s35, %s36
      %p40 = pneg %p34
      %p41 = scmp.eq.s32.totalorder %s11, 1
      %p42 = por %p40, %p41
      %p43 = scmp.ne.s32.totalorder %s35, %s38
      %p44 = scmp.eq.s32.totalorder %s11, 0
      %p45 = por %p43, %p44
      %p46 = scmp.ne.s32.totalorder %s35, %s38
      %p47 = scmp.eq.s32.totalorder %s16, 1
      %p48 = por %p46, %p47
      %p49 = scmp.ne.s32.totalorder %s38, %s39
      %p50 = scmp.eq.s32.totalorder %s16, 0
      %p51 = por %p49, %p50
      %p52 = scmp.ne.s32.totalorder %s38, %s39
      %p53 = scmp.eq.s32.totalorder %s17, 1
      %p54 = por %p52, %p53
      %p56 = scmp.ne.s32.totalorder %s39, %s55
      %p57 = scmp.eq.s32.totalorder %s17, 0
      %p58 = por %p56, %p57
      %s60 = sadd.s32 %s59, 1
      %p63 = scmp.eq.s32.totalorder %s11, 1
      %p64 = scmp.ne.s32.totalorder %s59, %s61
      %p65 = scmp.eq.s32.totalorder %s11, 0
      %p66 = por %p64, %p65
      %p67 = scmp.ne.s32.totalorder %s59, %s61
      %p68 = scmp.eq.s32.totalorder %s16, 1
      %p69 = por %p67, %p68
      %p70 = scmp.ne.s32.totalorder %s61, %s62
      %p71 = scmp.eq.s32.totalorder %s16, 0
      %p72 = por %p70, %p71
      %p73 = scmp.ne.s32.totalorder %s61, %s62
      %p74 = scmp.eq.s32.totalorder %s17, 1
      %p75 = por %p73, %p74
      %p77 = scmp.ne.s32.totalorder %s62, %s76
      %p78 = scmp.eq.s32.totalorder %s17, 0
      %p79 = por %p77, %p78
      %s80 = ssub.s32 %s18, %s30
      %s81 = ssub.s32 %s19, %s26
      %s82 = sor.u32 %s80, %s81
      %p83 = scmp.eq.s32.totalorder %s82, 0
      %s85 = sadd.s32 %s84, 1
      %s86 = scalar_select %p83, %s84, %s85
      %p89 = pneg %p83
      %p90 = scmp.eq.s32.totalorder %s11, 1
      %p91 = por %p89, %p90
      %p92 = scmp.ne.s32.totalorder %s84, %s87
      %p93 = scmp.eq.s32.totalorder %s11, 0
      %p94 = por %p92, %p93
      %p95 = scmp.ne.s32.totalorder %s84, %s87
      %p96 = scmp.eq.s32.totalorder %s16, 1
      %p97 = por %p95, %p96
      %p98 = scmp.ne.s32.totalorder %s87, %s88
      %p99 = scmp.eq.s32.totalorder %s16, 0
      %p100 = por %p98, %p99
      %p101 = scmp.ne.s32.totalorder %s87, %s88
      %p102 = scmp.eq.s32.totalorder %s17, 1
      %p103 = por %p101, %p102
      %p105 = scmp.ne.s32.totalorder %s88, %s104
      %p106 = scmp.eq.s32.totalorder %s17, 0
      %p107 = por %p105, %p106
      %p108 = scmp.le.s32.totalorder 1, %s11
      %p109 = scmp.lt.s32.totalorder %s11, 3
      %p110 = pnand %p108, %p109
      %p111 = pneg %p110
      // Predicated region
      $region9: #{tpu_custom_call.1} parent=5 // pred_check
        _
      $region10: #{tpu_custom_call.1} parent=5 // pred_check_branch
        %113 = sbr.rel (%p110) target = $region12
      $region11: #{tpu_custom_call.1} parent=5 // pred_region
        %s114 = ssub.s32 %s11, 1
        // Predicated region
        $region13: #{tpu_custom_call.1} parent=11 // pred_check
          %p115 = pneg %p72
        $region14: #{tpu_custom_call.1} parent=11 // pred_check_branch
          %117 = sbr.rel (%p115) target = $region16
        $region15: #{tpu_custom_call.1} parent=11 // pred_region
          _
        $region16: #{tpu_custom_call.1} parent=11 // pred_fallthru
          _
      $region12: #{tpu_custom_call.1} parent=5 // pred_fallthru
        _
      %p118 = scmp.lt.s32.totalorder %s11, 2
      // Predicated region
      $region17: #{tpu_custom_call.1} parent=5 // pred_check
        %p119 = pneg %p118
      $region18: #{tpu_custom_call.1} parent=5 // pred_check_branch
        %121 = sbr.rel (%p119) target = $region20
      $region19: #{tpu_custom_call.1} parent=5 // pred_region
        // Predicated region
        $region21: #{tpu_custom_call.1} parent=19 // pred_check
          %p122 = pneg %p45
        $region22: #{tpu_custom_call.1} parent=19 // pred_check_branch
          %124 = sbr.rel (%p122) target = $region24
        $region23: #{tpu_custom_call.1} parent=19 // pred_region
          %s125 = smul.u32 2, %s19
          %p126 = scmp.lt.s32.totalorder %s18, 1
          %s127 = scalar_select %p126, %s18, 1
          %p128 = scmp.lt.s32.totalorder %s125, 1
          %s129 = scalar_select %p128, %s125, 1
          %s130 = smul.addr %s127, 2
          %s131 = sadd.s32 %s129, %s130
          %s132 = smul.addr %s131, 4
          %s133 = scalar_lea.vmem %s0, %s132
          %s134 = smul.u32 2, %s19
        $region24: #{tpu_custom_call.1} parent=19 // pred_fallthru
          _
      $region20: #{tpu_custom_call.1} parent=5 // pred_fallthru
        _
      %p135 = scmp.le.s32.totalorder 1, %s11
      %p136 = scmp.lt.s32.totalorder %s11, 3
      %p137 = pnand %p135, %p136
      %p138 = pneg %p137
      // Predicated region
      $region25: #{tpu_custom_call.1} parent=5 // pred_check
        _
      $region26: #{tpu_custom_call.1} parent=5 // pred_check_branch
        %140 = sbr.rel (%p137) target = $region28
      $region27: #{tpu_custom_call.1} parent=5 // pred_region
        %s141 = ssub.s32 %s11, 1
        %s142 = smul.u32 2, %s21
        %p143 = scmp.lt.s32.totalorder %s20, 1
        %s144 = scalar_select %p143, %s20, 1
        %p145 = scmp.lt.s32.totalorder %s142, 1
        %s146 = scalar_select %p145, %s142, 1
        %s147 = smul.addr %s144, 2
        %s148 = sadd.s32 %s146, %s147
        %s149 = smul.addr %s148, 4
        %s150 = scalar_lea.vmem %s0, %s149
        %p151 = pneg %p51
        %p152 = pneg %p48
        %p153 = pneg %p72
        %p154 = pneg %p69
        %p155 = pneg %p100
        %p156 = pneg %p97
        %s157 = sand.u32 %s87, 1
        %s158 = scalar_lea.sflag [#allocation3], %s157
        %s159 = sand.u32 %s87, 1
        %s160 = smul.addr %s159, 64
        %s161 = scalar_lea.vmem [#allocation2], %s160
        %s162 = smul.u32 2, %s21
        %p163 = scmp.lt.s32.totalorder %s20, 1
        %s164 = scalar_select %p163, %s20, 1
        %p165 = scmp.lt.s32.totalorder %s162, 1
        %s166 = scalar_select %p165, %s162, 1
        %s167 = smul.addr %s164, 2
        %s168 = sadd.s32 %s166, %s167
        %s169 = smul.addr %s168, 4
        %s170 = scalar_lea.vmem %s0, %s169
        %s171 = smul.u32 2, %s21
        %s172 = smul.u32 2, %s21
        %v173 = vld [vmem:[%s1] sm:$0xff]
        %v174 = vld [vmem:[%s1 + $0x8] sm:$0xff]
        %v175 = vld [vmem:[%s1 + $0x10] sm:$0xff]
        %v176 = vld [vmem:[%s1 + $0x18] sm:$0xff]
        %s177 = scalar_lea.vmem %s1, 32
        %v178 = vld [vmem:[%s177] sm:$0xff]
        %v179 = vld [vmem:[%s177 + $0x8] sm:$0xff]
        %v180 = vld [vmem:[%s177 + $0x10] sm:$0xff]
        %v181 = vld [vmem:[%s177 + $0x18] sm:$0xff]
        %s182 = scalar_lea.vmem %s1, 64
        %v183 = vld [vmem:[%s182] sm:$0xff]
        %v184 = vld [vmem:[%s182 + $0x8] sm:$0xff]
        %v185 = vld [vmem:[%s182 + $0x10] sm:$0xff]
        %v186 = vld [vmem:[%s182 + $0x18] sm:$0xff]
        %v187 = vlaneseq
        %v188 = vshrl.u32 %v187, 7
        %v189 = vld [vmem:[%s170] sm:$0x77]
        %v190 = vlaneseq
        %v191 = vshrl.u32 %v190, 7
        %v192 = vsub.s32 0, %v191
        %v193 = vrot.slane %v189, %v192
        %v194 = vlaneseq
        %v195 = vshrl.u32 %v194, 7
        %v196 = vsub.s32 4, %v195
        %v197 = vrot.slane %v189, %v196
        %v198 = vlaneseq
        %v199 = vshrl.u32 %v198, 7
        %v200 = vsub.s32 0, %v199
        %v201 = vrot.slane %v193, %v200
        %v202 = vlaneseq
        %v203 = vshrl.u32 %v202, 7
        %v204 = vsub.s32 0, %v203
        %v205 = vrot.slane %v197, %v204
        %vm206 = vcmp.eq.s32.totalorder %v201, %v188
        %vm207 = vcmp.eq.s32.totalorder %v205, %v188
        %v208 = vsel %vm206, 1, 0
        %v209 = vsel %vm207, 1, 0
        %v210 = vcvt.s32.f32 %v208
        %v211 = vcvt.s32.f32 %v209
        %v212 = vlaneseq
        %v213 = vshrl.u32 %v212, 7
        %v214 = vsub.s32 1, %v213
        %v215 = vrot.slane %v189, %v214
        %v216 = vlaneseq
        %v217 = vshrl.u32 %v216, 7
        %v218 = vsub.s32 5, %v217
        %v219 = vrot.slane %v189, %v218
        %v220 = vlaneseq
        %v221 = vshrl.u32 %v220, 7
        %v222 = vsub.s32 1, %v221
        %v223 = vrot.slane %v215, %v222
        %v224 = vlaneseq
        %v225 = vshrl.u32 %v224, 7
        %v226 = vsub.s32 1, %v225
        %v227 = vrot.slane %v219, %v226
        %vm228 = vcmp.eq.s32.totalorder %v223, %v188
        %vm229 = vcmp.eq.s32.totalorder %v227, %v188
        %v230 = vsel %vm228, 1, 0
        %v231 = vsel %vm229, 1, 0
        %v232 = vcvt.s32.f32 %v230
        %v233 = vcvt.s32.f32 %v231
        %v234 = vlaneseq
        %v235 = vshrl.u32 %v234, 7
        %v236 = vsub.s32 2, %v235
        %v237 = vrot.slane %v189, %v236
        %v238 = vlaneseq
        %v239 = vshrl.u32 %v238, 7
        %v240 = vsub.s32 6, %v239
        %v241 = vrot.slane %v189, %v240
        %v242 = vlaneseq
        %v243 = vshrl.u32 %v242, 7
        %v244 = vsub.s32 2, %v243
        %v245 = vrot.slane %v237, %v244
        %v246 = vlaneseq
        %v247 = vshrl.u32 %v246, 7
        %v248 = vsub.s32 2, %v247
        %v249 = vrot.slane %v241, %v248
        %vm250 = vcmp.eq.s32.totalorder %v245, %v188
        %vm251 = vcmp.eq.s32.totalorder %v249, %v188
        %v252 = vsel %vm250, 1, 0
        %v253 = vsel %vm251, 1, 0
        %v254 = vcvt.s32.f32 %v252
        %v255 = vcvt.s32.f32 %v253
        %vm256 = vcmask 64512
        %v258 = vsel %vm256, %v178, 0
        %v261 = vsel %vm256, %v179, 0
        %v264 = vsel %vm256, %v180, 0
        %v267 = vsel %vm256, %v181, 0
        %269 = vmatprep.subr.mxu0 0.0
        %270 = vmatpush1.msra.mxu0 0.0
        %271 = vmatprep.subr.mxu0 0.0
        %272 = vmatpush1.msra.mxu0 0.0
        %273 = vmatprep.subr.mxu0 0.0
        %274 = vmatpush1.msra.mxu0 0.0
        %275 = vmatprep.subr.mxu0 0.0
        %276 = vmatpush1.msra.mxu0 0.0
        %277 = vmatprep.subr.mxu0 0.0
        %278 = vmatpush1.msra.mxu0 0.0
        %279 = vmatprep.subr.mxu0 0.0
        %280 = vmatpush1.msra.mxu0 0.0
        %281 = vmatprep.subr.mxu0 0.0
        %282 = vmatpush1.msra.mxu0 0.0
        %283 = vmatprep.subr.mxu0 0.0
        %284 = vmatpush1.msra.mxu0 0.0
        %285 = vmatprep.subr.mxu0 0.0
        %286 = vmatpush1.msra.mxu0 0.0
        %287 = vmatprep.subr.mxu0 0.0
        %288 = vmatpush1.msra.mxu0 0.0
        %289 = vmatprep.subr.mxu0 0.0
        %290 = vmatpush1.msra.mxu0 0.0
        %291 = vmatprep.subr.mxu0 0.0
        %292 = vmatpush1.msra.mxu0 0.0
        %293 = vmatprep.subr.mxu0 0.0
        %294 = vmatpush1.msra.mxu0 0.0
        %295 = vmatprep.subr.mxu0 0.0
        %296 = vmatpush1.msra.mxu0 0.0
        %297 = vmatprep.subr.mxu0 0.0
        %298 = vmatpush1.msra.mxu0 0.0
        %v299 = vand.u32 %v233, 4294901760
        %300 = vmatprep.subr.mxu0 %v299
        %v301 = vand.u32 %v232, 4294901760
        %302 = vmatpush1.msra.mxu0 %v301
        %303 = vmatprep.subr.mxu0 0.0
        %304 = vmatpush2.msra.mxu0 0.0
        %305 = vmatprep.subr.mxu0 0.0
        %306 = vmatpush2.msra.mxu0 0.0
        %307 = vmatprep.subr.mxu0 0.0
        %308 = vmatpush2.msra.mxu0 0.0
        %309 = vmatprep.subr.mxu0 0.0
        %310 = vmatpush2.msra.mxu0 0.0
        %311 = vmatprep.subr.mxu0 0.0
        %312 = vmatpush2.msra.mxu0 0.0
        %313 = vmatprep.subr.mxu0 0.0
        %314 = vmatpush2.msra.mxu0 0.0
        %315 = vmatprep.subr.mxu0 0.0
        %316 = vmatpush2.msra.mxu0 0.0
        %317 = vmatprep.subr.mxu0 0.0
        %318 = vmatpush2.msra.mxu0 0.0
        %319 = vmatprep.subr.mxu0 0.0
        %320 = vmatpush2.msra.mxu0 0.0
        %321 = vmatprep.subr.mxu0 0.0
        %322 = vmatpush2.msra.mxu0 0.0
        %323 = vmatprep.subr.mxu0 0.0
        %324 = vmatpush2.msra.mxu0 0.0
        %325 = vmatprep.subr.mxu0 0.0
        %326 = vmatpush2.msra.mxu0 0.0
        %327 = vmatprep.subr.mxu0 0.0
        %328 = vmatpush2.msra.mxu0 0.0
        %329 = vmatprep.subr.mxu0 0.0
        %330 = vmatpush2.msra.mxu0 0.0
        %331 = vmatprep.subr.mxu0 0.0
        %332 = vmatpush2.msra.mxu0 0.0
        %333 = vmatprep.subr.mxu0 0.0
        %334 = vmatpush2.msra.mxu0 0.0
        %335 = vmatprep.mubr.f32.mxu0 0.0
        %v336 = vand.u32 %v258, 4294901760
        %v337 = vsub.f32 %v258, %v336
        %v338 = vand.u32 %v337, 4294901760
        %v339 = vsub.f32 %v337, %v338
        %v340 = vand.u32 %v339, 4294901760
        %341 = vmatmul.mubr.f32.gmra.mxu0 %v340
        %v342 = vpop.f32.mrf.mxu0
        %v343 = vadd.f32 0.0, %v342
        %v344 = vpop.f32.mrf.mxu0
        %v345 = vadd.f32 0.0, %v344
        %346 = vmatprep.mubr.f32.mxu0 0.0
        %v347 = vand.u32 %v261, 4294901760
        %v348 = vsub.f32 %v261, %v347
        %v349 = vand.u32 %v348, 4294901760
        %v350 = vsub.f32 %v348, %v349
        %v351 = vand.u32 %v350, 4294901760
        %352 = vmatmul.mubr.f32.gmra.mxu0 %v351
        %v353 = vpop.f32.mrf.mxu0
        %v354 = vadd.f32 0.0, %v353
        %v355 = vpop.f32.mrf.mxu0
        %v356 = vadd.f32 0.0, %v355
        %357 = vmatprep.mubr.f32.mxu0 0.0
        %v358 = vand.u32 %v264, 4294901760
        %v359 = vsub.f32 %v264, %v358
        %v360 = vand.u32 %v359, 4294901760
        %v361 = vsub.f32 %v359, %v360
        %v362 = vand.u32 %v361, 4294901760
        %363 = vmatmul.mubr.f32.gmra.mxu0 %v362
        %v364 = vpop.f32.mrf.mxu0
        %v365 = vadd.f32 0.0, %v364
        %v366 = vpop.f32.mrf.mxu0
        %v367 = vadd.f32 0.0, %v366
        %368 = vmatprep.mubr.f32.mxu0 0.0
        %v369 = vand.u32 %v267, 4294901760
        %v370 = vsub.f32 %v267, %v369
        %v371 = vand.u32 %v370, 4294901760
        %v372 = vsub.f32 %v370, %v371
        %v373 = vand.u32 %v372, 4294901760
        %374 = vmatmul.mubr.f32.gmra.mxu0 %v373
        %v375 = vpop.f32.mrf.mxu0
        %v376 = vadd.f32 0.0, %v375
        %v377 = vpop.f32.mrf.mxu0
        %v378 = vadd.f32 0.0, %v377
        %379 = vdwg.mxu0
        %380 = vmatprep.subr.mxu0 0.0
        %381 = vmatpush1.msra.mxu0 0.0
        %382 = vmatprep.subr.mxu0 0.0
        %383 = vmatpush1.msra.mxu0 0.0
        %384 = vmatprep.subr.mxu0 0.0
        %385 = vmatpush1.msra.mxu0 0.0
        %386 = vmatprep.subr.mxu0 0.0
        %387 = vmatpush1.msra.mxu0 0.0
        %388 = vmatprep.subr.mxu0 0.0
        %389 = vmatpush1.msra.mxu0 0.0
        %390 = vmatprep.subr.mxu0 0.0
        %391 = vmatpush1.msra.mxu0 0.0
        %392 = vmatprep.subr.mxu0 0.0
        %393 = vmatpush1.msra.mxu0 0.0
        %394 = vmatprep.subr.mxu0 0.0
        %395 = vmatpush1.msra.mxu0 0.0
        %396 = vmatprep.subr.mxu0 0.0
        %397 = vmatpush1.msra.mxu0 0.0
        %398 = vmatprep.subr.mxu0 0.0
        %399 = vmatpush1.msra.mxu0 0.0
        %400 = vmatprep.subr.mxu0 0.0
        %401 = vmatpush1.msra.mxu0 0.0
        %402 = vmatprep.subr.mxu0 0.0
        %403 = vmatpush1.msra.mxu0 0.0
        %404 = vmatprep.subr.mxu0 0.0
        %405 = vmatpush1.msra.mxu0 0.0
        %406 = vmatprep.subr.mxu0 0.0
        %407 = vmatpush1.msra.mxu0 0.0
        %408 = vmatprep.subr.mxu0 0.0
        %409 = vmatpush1.msra.mxu0 0.0
        %v410 = vand.u32 %v233, 4294901760
        %v411 = vsub.f32 %v233, %v410
        %v412 = vand.u32 %v411, 4294901760
        %v413 = vsub.f32 %v411, %v412
        %v414 = vand.u32 %v413, 4294901760
        %415 = vmatprep.subr.mxu0 %v414
        %v416 = vand.u32 %v232, 4294901760
        %v417 = vsub.f32 %v232, %v416
        %v418 = vand.u32 %v417, 4294901760
        %v419 = vsub.f32 %v417, %v418
        %v420 = vand.u32 %v419, 4294901760
        %421 = vmatpush1.msra.mxu0 %v420
        %422 = vmatprep.subr.mxu0 0.0
        %423 = vmatpush2.msra.mxu0 0.0
        %424 = vmatprep.subr.mxu0 0.0
        %425 = vmatpush2.msra.mxu0 0.0
        %426 = vmatprep.subr.mxu0 0.0
        %427 = vmatpush2.msra.mxu0 0.0
        %428 = vmatprep.subr.mxu0 0.0
        %429 = vmatpush2.msra.mxu0 0.0
        %430 = vmatprep.subr.mxu0 0.0
        %431 = vmatpush2.msra.mxu0 0.0
        %432 = vmatprep.subr.mxu0 0.0
        %433 = vmatpush2.msra.mxu0 0.0
        %434 = vmatprep.subr.mxu0 0.0
        %435 = vmatpush2.msra.mxu0 0.0
        %436 = vmatprep.subr.mxu0 0.0
        %437 = vmatpush2.msra.mxu0 0.0
        %438 = vmatprep.subr.mxu0 0.0
        %439 = vmatpush2.msra.mxu0 0.0
        %440 = vmatprep.subr.mxu0 0.0
        %441 = vmatpush2.msra.mxu0 0.0
        %442 = vmatprep.subr.mxu0 0.0
        %443 = vmatpush2.msra.mxu0 0.0
        %444 = vmatprep.subr.mxu0 0.0
        %445 = vmatpush2.msra.mxu0 0.0
        %446 = vmatprep.subr.mxu0 0.0
        %447 = vmatpush2.msra.mxu0 0.0
        %448 = vmatprep.subr.mxu0 0.0
        %449 = vmatpush2.msra.mxu0 0.0
        %450 = vmatprep.subr.mxu0 0.0
        %451 = vmatpush2.msra.mxu0 0.0
        %452 = vmatprep.subr.mxu0 0.0
        %453 = vmatpush2.msra.mxu0 0.0
        %454 = vmatprep.mubr.f32.mxu0 0.0
        %v455 = vand.u32 %v258, 4294901760
        %456 = vmatmul.mubr.f32.gmra.mxu0 %v455
        %v457 = vpop.f32.mrf.mxu0
        %v458 = vadd.f32 %v343, %v457
        %v459 = vpop.f32.mrf.mxu0
        %v460 = vadd.f32 %v345, %v459
        %461 = vmatprep.mubr.f32.mxu0 0.0
        %v462 = vand.u32 %v261, 4294901760
        %463 = vmatmul.mubr.f32.gmra.mxu0 %v462
        %v464 = vpop.f32.mrf.mxu0
        %v465 = vadd.f32 %v354, %v464
        %v466 = vpop.f32.mrf.mxu0
        %v467 = vadd.f32 %v356, %v466
        %468 = vmatprep.mubr.f32.mxu0 0.0
        %v469 = vand.u32 %v264, 4294901760
        %470 = vmatmul.mubr.f32.gmra.mxu0 %v469
        %v471 = vpop.f32.mrf.mxu0
        %v472 = vadd.f32 %v365, %v471
        %v473 = vpop.f32.mrf.mxu0
        %v474 = vadd.f32 %v367, %v473
        %475 = vmatprep.mubr.f32.mxu0 0.0
        %v476 = vand.u32 %v267, 4294901760
        %477 = vmatmul.mubr.f32.gmra.mxu0 %v476
        %v478 = vpop.f32.mrf.mxu0
        %v479 = vadd.f32 %v376, %v478
        %v480 = vpop.f32.mrf.mxu0
        %v481 = vadd.f32 %v378, %v480
        %482 = vdwg.mxu0
        %483 = vmatprep.subr.mxu0 0.0
        %484 = vmatpush1.msra.mxu0 0.0
        %485 = vmatprep.subr.mxu0 0.0
        %486 = vmatpush1.msra.mxu0 0.0
        %487 = vmatprep.subr.mxu0 0.0
        %488 = vmatpush1.msra.mxu0 0.0
        %489 = vmatprep.subr.mxu0 0.0
        %490 = vmatpush1.msra.mxu0 0.0
        %491 = vmatprep.subr.mxu0 0.0
        %492 = vmatpush1.msra.mxu0 0.0
        %493 = vmatprep.subr.mxu0 0.0
        %494 = vmatpush1.msra.mxu0 0.0
        %495 = vmatprep.subr.mxu0 0.0
        %496 = vmatpush1.msra.mxu0 0.0
        %497 = vmatprep.subr.mxu0 0.0
        %498 = vmatpush1.msra.mxu0 0.0
        %499 = vmatprep.subr.mxu0 0.0
        %500 = vmatpush1.msra.mxu0 0.0
        %501 = vmatprep.subr.mxu0 0.0
        %502 = vmatpush1.msra.mxu0 0.0
        %503 = vmatprep.subr.mxu0 0.0
        %504 = vmatpush1.msra.mxu0 0.0
        %505 = vmatprep.subr.mxu0 0.0
        %506 = vmatpush1.msra.mxu0 0.0
        %507 = vmatprep.subr.mxu0 0.0
        %508 = vmatpush1.msra.mxu0 0.0
        %509 = vmatprep.subr.mxu0 0.0
        %510 = vmatpush1.msra.mxu0 0.0
        %511 = vmatprep.subr.mxu0 0.0
        %512 = vmatpush1.msra.mxu0 0.0
        %v513 = vand.u32 %v233, 4294901760
        %v514 = vsub.f32 %v233, %v513
        %515 = vmatprep.subr.mxu0 %v514
        %v516 = vand.u32 %v232, 4294901760
        %v517 = vsub.f32 %v232, %v516
        %518 = vmatpush1.msra.mxu0 %v517
        %519 = vmatprep.subr.mxu0 0.0
        %520 = vmatpush2.msra.mxu0 0.0
        %521 = vmatprep.subr.mxu0 0.0
        %522 = vmatpush2.msra.mxu0 0.0
        %523 = vmatprep.subr.mxu0 0.0
        %524 = vmatpush2.msra.mxu0 0.0
        %525 = vmatprep.subr.mxu0 0.0
        %526 = vmatpush2.msra.mxu0 0.0
        %527 = vmatprep.subr.mxu0 0.0
        %528 = vmatpush2.msra.mxu0 0.0
        %529 = vmatprep.subr.mxu0 0.0
        %530 = vmatpush2.msra.mxu0 0.0
        %531 = vmatprep.subr.mxu0 0.0
        %532 = vmatpush2.msra.mxu0 0.0
        %533 = vmatprep.subr.mxu0 0.0
        %534 = vmatpush2.msra.mxu0 0.0
        %535 = vmatprep.subr.mxu0 0.0
        %536 = vmatpush2.msra.mxu0 0.0
        %537 = vmatprep.subr.mxu0 0.0
        %538 = vmatpush2.msra.mxu0 0.0
        %539 = vmatprep.subr.mxu0 0.0
        %540 = vmatpush2.msra.mxu0 0.0
        %541 = vmatprep.subr.mxu0 0.0
        %542 = vmatpush2.msra.mxu0 0.0
        %543 = vmatprep.subr.mxu0 0.0
        %544 = vmatpush2.msra.mxu0 0.0
        %545 = vmatprep.subr.mxu0 0.0
        %546 = vmatpush2.msra.mxu0 0.0
        %547 = vmatprep.subr.mxu0 0.0
        %548 = vmatpush2.msra.mxu0 0.0
        %549 = vmatprep.subr.mxu0 0.0
        %550 = vmatpush2.msra.mxu0 0.0
        %551 = vmatprep.mubr.f32.mxu0 0.0
        %v552 = vand.u32 %v258, 4294901760
        %v553 = vsub.f32 %v258, %v552
        %554 = vmatmul.mubr.f32.gmra.mxu0 %v553
        %v555 = vpop.f32.mrf.mxu0
        %v556 = vadd.f32 %v458, %v555
        %v557 = vpop.f32.mrf.mxu0
        %v558 = vadd.f32 %v460, %v557
        %559 = vmatprep.mubr.f32.mxu0 0.0
        %v560 = vand.u32 %v261, 4294901760
        %v561 = vsub.f32 %v261, %v560
        %562 = vmatmul.mubr.f32.gmra.mxu0 %v561
        %v563 = vpop.f32.mrf.mxu0
        %v564 = vadd.f32 %v465, %v563
        %v565 = vpop.f32.mrf.mxu0
        %v566 = vadd.f32 %v467, %v565
        %567 = vmatprep.mubr.f32.mxu0 0.0
        %v568 = vand.u32 %v264, 4294901760
        %v569 = vsub.f32 %v264, %v568
        %570 = vmatmul.mubr.f32.gmra.mxu0 %v569
        %v571 = vpop.f32.mrf.mxu0
        %v572 = vadd.f32 %v472, %v571
        %v573 = vpop.f32.mrf.mxu0
        %v574 = vadd.f32 %v474, %v573
        %575 = vmatprep.mubr.f32.mxu0 0.0
        %v576 = vand.u32 %v267, 4294901760
        %v577 = vsub.f32 %v267, %v576
        %578 = vmatmul.mubr.f32.gmra.mxu0 %v577
        %v579 = vpop.f32.mrf.mxu0
        %v580 = vadd.f32 %v479, %v579
        %v581 = vpop.f32.mrf.mxu0
        %v582 = vadd.f32 %v481, %v581
        %583 = vdwg.mxu0
        %584 = vmatprep.subr.mxu0 0.0
        %585 = vmatpush1.msra.mxu0 0.0
        %586 = vmatprep.subr.mxu0 0.0
        %587 = vmatpush1.msra.mxu0 0.0
        %588 = vmatprep.subr.mxu0 0.0
        %589 = vmatpush1.msra.mxu0 0.0
        %590 = vmatprep.subr.mxu0 0.0
        %591 = vmatpush1.msra.mxu0 0.0
        %592 = vmatprep.subr.mxu0 0.0
        %593 = vmatpush1.msra.mxu0 0.0
        %594 = vmatprep.subr.mxu0 0.0
        %595 = vmatpush1.msra.mxu0 0.0
        %596 = vmatprep.subr.mxu0 0.0
        %597 = vmatpush1.msra.mxu0 0.0
        %598 = vmatprep.subr.mxu0 0.0
        %599 = vmatpush1.msra.mxu0 0.0
        %600 = vmatprep.subr.mxu0 0.0
        %601 = vmatpush1.msra.mxu0 0.0
        %602 = vmatprep.subr.mxu0 0.0
        %603 = vmatpush1.msra.mxu0 0.0
        %604 = vmatprep.subr.mxu0 0.0
        %605 = vmatpush1.msra.mxu0 0.0
        %606 = vmatprep.subr.mxu0 0.0
        %607 = vmatpush1.msra.mxu0 0.0
        %608 = vmatprep.subr.mxu0 0.0
        %609 = vmatpush1.msra.mxu0 0.0
        %610 = vmatprep.subr.mxu0 0.0
        %611 = vmatpush1.msra.mxu0 0.0
        %612 = vmatprep.subr.mxu0 0.0
        %613 = vmatpush1.msra.mxu0 0.0
        %v614 = vand.u32 %v233, 4294901760
        %615 = vmatprep.subr.mxu0 %v614
        %v616 = vand.u32 %v232, 4294901760
        %617 = vmatpush1.msra.mxu0 %v616
        %618 = vmatprep.subr.mxu0 0.0
        %619 = vmatpush2.msra.mxu0 0.0
        %620 = vmatprep.subr.mxu0 0.0
        %621 = vmatpush2.msra.mxu0 0.0
        %622 = vmatprep.subr.mxu0 0.0
        %623 = vmatpush2.msra.mxu0 0.0
        %624 = vmatprep.subr.mxu0 0.0
        %625 = vmatpush2.msra.mxu0 0.0
        %626 = vmatprep.subr.mxu0 0.0
        %627 = vmatpush2.msra.mxu0 0.0
        %628 = vmatprep.subr.mxu0 0.0
        %629 = vmatpush2.msra.mxu0 0.0
        %630 = vmatprep.subr.mxu0 0.0
        %631 = vmatpush2.msra.mxu0 0.0
        %632 = vmatprep.subr.mxu0 0.0
        %633 = vmatpush2.msra.mxu0 0.0
        %634 = vmatprep.subr.mxu0 0.0
        %635 = vmatpush2.msra.mxu0 0.0
        %636 = vmatprep.subr.mxu0 0.0
        %637 = vmatpush2.msra.mxu0 0.0
        %638 = vmatprep.subr.mxu0 0.0
        %639 = vmatpush2.msra.mxu0 0.0
        %640 = vmatprep.subr.mxu0 0.0
        %641 = vmatpush2.msra.mxu0 0.0
        %642 = vmatprep.subr.mxu0 0.0
        %643 = vmatpush2.msra.mxu0 0.0
        %644 = vmatprep.subr.mxu0 0.0
        %645 = vmatpush2.msra.mxu0 0.0
        %646 = vmatprep.subr.mxu0 0.0
        %647 = vmatpush2.msra.mxu0 0.0
        %648 = vmatprep.subr.mxu0 0.0
        %649 = vmatpush2.msra.mxu0 0.0
        %650 = vmatprep.mubr.f32.mxu0 0.0
        %v651 = vand.u32 %v258, 4294901760
        %v652 = vsub.f32 %v258, %v651
        %v653 = vand.u32 %v652, 4294901760
        %654 = vmatmul.mubr.f32.gmra.mxu0 %v653
        %v655 = vpop.f32.mrf.mxu0
        %v656 = vadd.f32 %v556, %v655
        %v657 = vpop.f32.mrf.mxu0
        %v658 = vadd.f32 %v558, %v657
        %659 = vmatprep.mubr.f32.mxu0 0.0
        %v660 = vand.u32 %v261, 4294901760
        %v661 = vsub.f32 %v261, %v660
        %v662 = vand.u32 %v661, 4294901760
        %663 = vmatmul.mubr.f32.gmra.mxu0 %v662
        %v664 = vpop.f32.mrf.mxu0
        %v665 = vadd.f32 %v564, %v664
        %v666 = vpop.f32.mrf.mxu0
        %v667 = vadd.f32 %v566, %v666
        %668 = vmatprep.mubr.f32.mxu0 0.0
        %v669 = vand.u32 %v264, 4294901760
        %v670 = vsub.f32 %v264, %v669
        %v671 = vand.u32 %v670, 4294901760
        %672 = vmatmul.mubr.f32.gmra.mxu0 %v671
        %v673 = vpop.f32.mrf.mxu0
        %v674 = vadd.f32 %v572, %v673
        %v675 = vpop.f32.mrf.mxu0
        %v676 = vadd.f32 %v574, %v675
        %677 = vmatprep.mubr.f32.mxu0 0.0
        %v678 = vand.u32 %v267, 4294901760
        %v679 = vsub.f32 %v267, %v678
        %v680 = vand.u32 %v679, 4294901760
        %681 = vmatmul.mubr.f32.gmra.mxu0 %v680
        %v682 = vpop.f32.mrf.mxu0
        %v683 = vadd.f32 %v580, %v682
        %v684 = vpop.f32.mrf.mxu0
        %v685 = vadd.f32 %v582, %v684
        %686 = vdwg.mxu0
        %687 = vmatprep.subr.mxu0 0.0
        %688 = vmatpush1.msra.mxu0 0.0
        %689 = vmatprep.subr.mxu0 0.0
        %690 = vmatpush1.msra.mxu0 0.0
        %691 = vmatprep.subr.mxu0 0.0
        %692 = vmatpush1.msra.mxu0 0.0
        %693 = vmatprep.subr.mxu0 0.0
        %694 = vmatpush1.msra.mxu0 0.0
        %695 = vmatprep.subr.mxu0 0.0
        %696 = vmatpush1.msra.mxu0 0.0
        %697 = vmatprep.subr.mxu0 0.0
        %698 = vmatpush1.msra.mxu0 0.0
        %699 = vmatprep.subr.mxu0 0.0
        %700 = vmatpush1.msra.mxu0 0.0
        %701 = vmatprep.subr.mxu0 0.0
        %702 = vmatpush1.msra.mxu0 0.0
        %703 = vmatprep.subr.mxu0 0.0
        %704 = vmatpush1.msra.mxu0 0.0
        %705 = vmatprep.subr.mxu0 0.0
        %706 = vmatpush1.msra.mxu0 0.0
        %707 = vmatprep.subr.mxu0 0.0
        %708 = vmatpush1.msra.mxu0 0.0
        %709 = vmatprep.subr.mxu0 0.0
        %710 = vmatpush1.msra.mxu0 0.0
        %711 = vmatprep.subr.mxu0 0.0
        %712 = vmatpush1.msra.mxu0 0.0
        %713 = vmatprep.subr.mxu0 0.0
        %714 = vmatpush1.msra.mxu0 0.0
        %715 = vmatprep.subr.mxu0 0.0
        %716 = vmatpush1.msra.mxu0 0.0
        %v717 = vand.u32 %v233, 4294901760
        %v718 = vsub.f32 %v233, %v717
        %v719 = vand.u32 %v718, 4294901760
        %720 = vmatprep.subr.mxu0 %v719
        %v721 = vand.u32 %v232, 4294901760
        %v722 = vsub.f32 %v232, %v721
        %v723 = vand.u32 %v722, 4294901760
        %724 = vmatpush1.msra.mxu0 %v723
        %725 = vmatprep.subr.mxu0 0.0
        %726 = vmatpush2.msra.mxu0 0.0
        %727 = vmatprep.subr.mxu0 0.0
        %728 = vmatpush2.msra.mxu0 0.0
        %729 = vmatprep.subr.mxu0 0.0
        %730 = vmatpush2.msra.mxu0 0.0
        %731 = vmatprep.subr.mxu0 0.0
        %732 = vmatpush2.msra.mxu0 0.0
        %733 = vmatprep.subr.mxu0 0.0
        %734 = vmatpush2.msra.mxu0 0.0
        %735 = vmatprep.subr.mxu0 0.0
        %736 = vmatpush2.msra.mxu0 0.0
        %737 = vmatprep.subr.mxu0 0.0
        %738 = vmatpush2.msra.mxu0 0.0
        %739 = vmatprep.subr.mxu0 0.0
        %740 = vmatpush2.msra.mxu0 0.0
        %741 = vmatprep.subr.mxu0 0.0
        %742 = vmatpush2.msra.mxu0 0.0
        %743 = vmatprep.subr.mxu0 0.0
        %744 = vmatpush2.msra.mxu0 0.0
        %745 = vmatprep.subr.mxu0 0.0
        %746 = vmatpush2.msra.mxu0 0.0
        %747 = vmatprep.subr.mxu0 0.0
        %748 = vmatpush2.msra.mxu0 0.0
        %749 = vmatprep.subr.mxu0 0.0
        %750 = vmatpush2.msra.mxu0 0.0
        %751 = vmatprep.subr.mxu0 0.0
        %752 = vmatpush2.msra.mxu0 0.0
        %753 = vmatprep.subr.mxu0 0.0
        %754 = vmatpush2.msra.mxu0 0.0
        %755 = vmatprep.subr.mxu0 0.0
        %756 = vmatpush2.msra.mxu0 0.0
        %757 = vmatprep.mubr.f32.mxu0 0.0
        %v758 = vand.u32 %v258, 4294901760
        %759 = vmatmul.mubr.f32.gmra.mxu0 %v758
        %v760 = vpop.f32.mrf.mxu0
        %v761 = vadd.f32 %v656, %v760
        %v762 = vpop.f32.mrf.mxu0
        %v763 = vadd.f32 %v658, %v762
        %764 = vmatprep.mubr.f32.mxu0 0.0
        %v765 = vand.u32 %v261, 4294901760
        %766 = vmatmul.mubr.f32.gmra.mxu0 %v765
        %v767 = vpop.f32.mrf.mxu0
        %v768 = vadd.f32 %v665, %v767
        %v769 = vpop.f32.mrf.mxu0
        %v770 = vadd.f32 %v667, %v769
        %771 = vmatprep.mubr.f32.mxu0 0.0
        %v772 = vand.u32 %v264, 4294901760
        %773 = vmatmul.mubr.f32.gmra.mxu0 %v772
        %v774 = vpop.f32.mrf.mxu0
        %v775 = vadd.f32 %v674, %v774
        %v776 = vpop.f32.mrf.mxu0
        %v777 = vadd.f32 %v676, %v776
        %778 = vmatprep.mubr.f32.mxu0 0.0
        %v779 = vand.u32 %v267, 4294901760
        %780 = vmatmul.mubr.f32.gmra.mxu0 %v779
        %v781 = vpop.f32.mrf.mxu0
        %v782 = vadd.f32 %v683, %v781
        %v783 = vpop.f32.mrf.mxu0
        %v784 = vadd.f32 %v685, %v783
        %785 = vdwg.mxu0
        %786 = vmatprep.subr.mxu0 0.0
        %787 = vmatpush1.msra.mxu0 0.0
        %788 = vmatprep.subr.mxu0 0.0
        %789 = vmatpush1.msra.mxu0 0.0
        %790 = vmatprep.subr.mxu0 0.0
        %791 = vmatpush1.msra.mxu0 0.0
        %792 = vmatprep.subr.mxu0 0.0
        %793 = vmatpush1.msra.mxu0 0.0
        %794 = vmatprep.subr.mxu0 0.0
        %795 = vmatpush1.msra.mxu0 0.0
        %796 = vmatprep.subr.mxu0 0.0
        %797 = vmatpush1.msra.mxu0 0.0
        %798 = vmatprep.subr.mxu0 0.0
        %799 = vmatpush1.msra.mxu0 0.0
        %800 = vmatprep.subr.mxu0 0.0
        %801 = vmatpush1.msra.mxu0 0.0
        %802 = vmatprep.subr.mxu0 0.0
        %803 = vmatpush1.msra.mxu0 0.0
        %804 = vmatprep.subr.mxu0 0.0
        %805 = vmatpush1.msra.mxu0 0.0
        %806 = vmatprep.subr.mxu0 0.0
        %807 = vmatpush1.msra.mxu0 0.0
        %808 = vmatprep.subr.mxu0 0.0
        %809 = vmatpush1.msra.mxu0 0.0
        %810 = vmatprep.subr.mxu0 0.0
        %811 = vmatpush1.msra.mxu0 0.0
        %812 = vmatprep.subr.mxu0 0.0
        %813 = vmatpush1.msra.mxu0 0.0
        %814 = vmatprep.subr.mxu0 0.0
        %815 = vmatpush1.msra.mxu0 0.0
        %v816 = vand.u32 %v233, 4294901760
        %817 = vmatprep.subr.mxu0 %v816
        %v818 = vand.u32 %v232, 4294901760
        %819 = vmatpush1.msra.mxu0 %v818
        %820 = vmatprep.subr.mxu0 0.0
        %821 = vmatpush2.msra.mxu0 0.0
        %822 = vmatprep.subr.mxu0 0.0
        %823 = vmatpush2.msra.mxu0 0.0
        %824 = vmatprep.subr.mxu0 0.0
        %825 = vmatpush2.msra.mxu0 0.0
        %826 = vmatprep.subr.mxu0 0.0
        %827 = vmatpush2.msra.mxu0 0.0
        %828 = vmatprep.subr.mxu0 0.0
        %829 = vmatpush2.msra.mxu0 0.0
        %830 = vmatprep.subr.mxu0 0.0
        %831 = vmatpush2.msra.mxu0 0.0
        %832 = vmatprep.subr.mxu0 0.0
        %833 = vmatpush2.msra.mxu0 0.0
        %834 = vmatprep.subr.mxu0 0.0
        %835 = vmatpush2.msra.mxu0 0.0
        %836 = vmatprep.subr.mxu0 0.0
        %837 = vmatpush2.msra.mxu0 0.0
        %838 = vmatprep.subr.mxu0 0.0
        %839 = vmatpush2.msra.mxu0 0.0
        %840 = vmatprep.subr.mxu0 0.0
        %841 = vmatpush2.msra.mxu0 0.0
        %842 = vmatprep.subr.mxu0 0.0
        %843 = vmatpush2.msra.mxu0 0.0
        %844 = vmatprep.subr.mxu0 0.0
        %845 = vmatpush2.msra.mxu0 0.0
        %846 = vmatprep.subr.mxu0 0.0
        %847 = vmatpush2.msra.mxu0 0.0
        %848 = vmatprep.subr.mxu0 0.0
        %849 = vmatpush2.msra.mxu0 0.0
        %850 = vmatprep.subr.mxu0 0.0
        %851 = vmatpush2.msra.mxu0 0.0
        %852 = vmatprep.mubr.f32.mxu0 0.0
        %v853 = vand.u32 %v258, 4294901760
        %854 = vmatmul.mubr.f32.gmra.mxu0 %v853
        %v855 = vpop.f32.mrf.mxu0
        %v856 = vadd.f32 %v761, %v855
        %v857 = vpop.f32.mrf.mxu0
        %v858 = vadd.f32 %v763, %v857
        %859 = vmatprep.mubr.f32.mxu0 0.0
        %v860 = vand.u32 %v261, 4294901760
        %861 = vmatmul.mubr.f32.gmra.mxu0 %v860
        %v862 = vpop.f32.mrf.mxu0
        %v863 = vadd.f32 %v768, %v862
        %v864 = vpop.f32.mrf.mxu0
        %v865 = vadd.f32 %v770, %v864
        %866 = vmatprep.mubr.f32.mxu0 0.0
        %v867 = vand.u32 %v264, 4294901760
        %868 = vmatmul.mubr.f32.gmra.mxu0 %v867
        %v869 = vpop.f32.mrf.mxu0
        %v870 = vadd.f32 %v775, %v869
        %v871 = vpop.f32.mrf.mxu0
        %v872 = vadd.f32 %v777, %v871
        %873 = vmatprep.mubr.f32.mxu0 0.0
        %v874 = vand.u32 %v267, 4294901760
        %875 = vmatmul.mubr.f32.gmra.mxu0 %v874
        %v876 = vpop.f32.mrf.mxu0
        %v877 = vadd.f32 %v782, %v876
        %v878 = vpop.f32.mrf.mxu0
        %v879 = vadd.f32 %v784, %v878
        %880 = vdwg.mxu0
        %v882 = vsel %vm256, %v173, 0
        %v885 = vsel %vm256, %v174, 0
        %v888 = vsel %vm256, %v175, 0
        %v891 = vsel %vm256, %v176, 0
        %893 = vmatprep.subr.mxu0 0.0
        %894 = vmatpush1.msra.mxu0 0.0
        %895 = vmatprep.subr.mxu0 0.0
        %896 = vmatpush1.msra.mxu0 0.0
        %897 = vmatprep.subr.mxu0 0.0
        %898 = vmatpush1.msra.mxu0 0.0
        %899 = vmatprep.subr.mxu0 0.0
        %900 = vmatpush1.msra.mxu0 0.0
        %901 = vmatprep.subr.mxu0 0.0
        %902 = vmatpush1.msra.mxu0 0.0
        %903 = vmatprep.subr.mxu0 0.0
        %904 = vmatpush1.msra.mxu0 0.0
        %905 = vmatprep.subr.mxu0 0.0
        %906 = vmatpush1.msra.mxu0 0.0
        %907 = vmatprep.subr.mxu0 0.0
        %908 = vmatpush1.msra.mxu0 0.0
        %909 = vmatprep.subr.mxu0 0.0
        %910 = vmatpush1.msra.mxu0 0.0
        %911 = vmatprep.subr.mxu0 0.0
        %912 = vmatpush1.msra.mxu0 0.0
        %913 = vmatprep.subr.mxu0 0.0
        %914 = vmatpush1.msra.mxu0 0.0
        %915 = vmatprep.subr.mxu0 0.0
        %916 = vmatpush1.msra.mxu0 0.0
        %917 = vmatprep.subr.mxu0 0.0
        %918 = vmatpush1.msra.mxu0 0.0
        %919 = vmatprep.subr.mxu0 0.0
        %920 = vmatpush1.msra.mxu0 0.0
        %921 = vmatprep.subr.mxu0 0.0
        %922 = vmatpush1.msra.mxu0 0.0
        %v923 = vand.u32 %v211, 4294901760
        %924 = vmatprep.subr.mxu0 %v923
        %v925 = vand.u32 %v210, 4294901760
        %926 = vmatpush1.msra.mxu0 %v925
        %927 = vmatprep.subr.mxu0 0.0
        %928 = vmatpush2.msra.mxu0 0.0
        %929 = vmatprep.subr.mxu0 0.0
        %930 = vmatpush2.msra.mxu0 0.0
        %931 = vmatprep.subr.mxu0 0.0
        %932 = vmatpush2.msra.mxu0 0.0
        %933 = vmatprep.subr.mxu0 0.0
        %934 = vmatpush2.msra.mxu0 0.0
        %935 = vmatprep.subr.mxu0 0.0
        %936 = vmatpush2.msra.mxu0 0.0
        %937 = vmatprep.subr.mxu0 0.0
        %938 = vmatpush2.msra.mxu0 0.0
        %939 = vmatprep.subr.mxu0 0.0
        %940 = vmatpush2.msra.mxu0 0.0
        %941 = vmatprep.subr.mxu0 0.0
        %942 = vmatpush2.msra.mxu0 0.0
        %943 = vmatprep.subr.mxu0 0.0
        %944 = vmatpush2.msra.mxu0 0.0
        %945 = vmatprep.subr.mxu0 0.0
        %946 = vmatpush2.msra.mxu0 0.0
        %947 = vmatprep.subr.mxu0 0.0
        %948 = vmatpush2.msra.mxu0 0.0
        %949 = vmatprep.subr.mxu0 0.0
        %950 = vmatpush2.msra.mxu0 0.0
        %951 = vmatprep.subr.mxu0 0.0
        %952 = vmatpush2.msra.mxu0 0.0
        %953 = vmatprep.subr.mxu0 0.0
        %954 = vmatpush2.msra.mxu0 0.0
        %955 = vmatprep.subr.mxu0 0.0
        %956 = vmatpush2.msra.mxu0 0.0
        %957 = vmatprep.subr.mxu0 0.0
        %958 = vmatpush2.msra.mxu0 0.0
        %959 = vmatprep.mubr.f32.mxu0 0.0
        %v960 = vand.u32 %v882, 4294901760
        %v961 = vsub.f32 %v882, %v960
        %v962 = vand.u32 %v961, 4294901760
        %v963 = vsub.f32 %v961, %v962
        %v964 = vand.u32 %v963, 4294901760
        %965 = vmatmul.mubr.f32.gmra.mxu0 %v964
        %v966 = vpop.f32.mrf.mxu0
        %v967 = vadd.f32 %v856, %v966
        %v968 = vpop.f32.mrf.mxu0
        %v969 = vadd.f32 %v858, %v968
        %970 = vmatprep.mubr.f32.mxu0 0.0
        %v971 = vand.u32 %v885, 4294901760
        %v972 = vsub.f32 %v885, %v971
        %v973 = vand.u32 %v972, 4294901760
        %v974 = vsub.f32 %v972, %v973
        %v975 = vand.u32 %v974, 4294901760
        %976 = vmatmul.mubr.f32.gmra.mxu0 %v975
        %v977 = vpop.f32.mrf.mxu0
        %v978 = vadd.f32 %v863, %v977
        %v979 = vpop.f32.mrf.mxu0
        %v980 = vadd.f32 %v865, %v979
        %981 = vmatprep.mubr.f32.mxu0 0.0
        %v982 = vand.u32 %v888, 4294901760
        %v983 = vsub.f32 %v888, %v982
        %v984 = vand.u32 %v983, 4294901760
        %v985 = vsub.f32 %v983, %v984
        %v986 = vand.u32 %v985, 4294901760
        %987 = vmatmul.mubr.f32.gmra.mxu0 %v986
        %v988 = vpop.f32.mrf.mxu0
        %v989 = vadd.f32 %v870, %v988
        %v990 = vpop.f32.mrf.mxu0
        %v991 = vadd.f32 %v872, %v990
        %992 = vmatprep.mubr.f32.mxu0 0.0
        %v993 = vand.u32 %v891, 4294901760
        %v994 = vsub.f32 %v891, %v993
        %v995 = vand.u32 %v994, 4294901760
        %v996 = vsub.f32 %v994, %v995
        %v997 = vand.u32 %v996, 4294901760
        %998 = vmatmul.mubr.f32.gmra.mxu0 %v997
        %v999 = vpop.f32.mrf.mxu0
        %v1000 = vadd.f32 %v877, %v999
        %v1001 = vpop.f32.mrf.mxu0
        %v1002 = vadd.f32 %v879, %v1001
        %1003 = vdwg.mxu0
        %1004 = vmatprep.subr.mxu0 0.0
        %1005 = vmatpush1.msra.mxu0 0.0
        %1006 = vmatprep.subr.mxu0 0.0
        %1007 = vmatpush1.msra.mxu0 0.0
        %1008 = vmatprep.subr.mxu0 0.0
        %1009 = vmatpush1.msra.mxu0 0.0
        %1010 = vmatprep.subr.mxu0 0.0
        %1011 = vmatpush1.msra.mxu0 0.0
        %1012 = vmatprep.subr.mxu0 0.0
        %1013 = vmatpush1.msra.mxu0 0.0
        %1014 = vmatprep.subr.mxu0 0.0
        %1015 = vmatpush1.msra.mxu0 0.0
        %1016 = vmatprep.subr.mxu0 0.0
        %1017 = vmatpush1.msra.mxu0 0.0
        %1018 = vmatprep.subr.mxu0 0.0
        %1019 = vmatpush1.msra.mxu0 0.0
        %1020 = vmatprep.subr.mxu0 0.0
        %1021 = vmatpush1.msra.mxu0 0.0
        %1022 = vmatprep.subr.mxu0 0.0
        %1023 = vmatpush1.msra.mxu0 0.0
        %1024 = vmatprep.subr.mxu0 0.0
        %1025 = vmatpush1.msra.mxu0 0.0
        %1026 = vmatprep.subr.mxu0 0.0
        %1027 = vmatpush1.msra.mxu0 0.0
        %1028 = vmatprep.subr.mxu0 0.0
        %1029 = vmatpush1.msra.mxu0 0.0
        %1030 = vmatprep.subr.mxu0 0.0
        %1031 = vmatpush1.msra.mxu0 0.0
        %1032 = vmatprep.subr.mxu0 0.0
        %1033 = vmatpush1.msra.mxu0 0.0
        %v1034 = vand.u32 %v211, 4294901760
        %v1035 = vsub.f32 %v211, %v1034
        %v1036 = vand.u32 %v1035, 4294901760
        %v1037 = vsub.f32 %v1035, %v1036
        %v1038 = vand.u32 %v1037, 4294901760
        %1039 = vmatprep.subr.mxu0 %v1038
        %v1040 = vand.u32 %v210, 4294901760
        %v1041 = vsub.f32 %v210, %v1040
        %v1042 = vand.u32 %v1041, 4294901760
        %v1043 = vsub.f32 %v1041, %v1042
        %v1044 = vand.u32 %v1043, 4294901760
        %1045 = vmatpush1.msra.mxu0 %v1044
        %1046 = vmatprep.subr.mxu0 0.0
        %1047 = vmatpush2.msra.mxu0 0.0
        %1048 = vmatprep.subr.mxu0 0.0
        %1049 = vmatpush2.msra.mxu0 0.0
        %1050 = vmatprep.subr.mxu0 0.0
        %1051 = vmatpush2.msra.mxu0 0.0
        %1052 = vmatprep.subr.mxu0 0.0
        %1053 = vmatpush2.msra.mxu0 0.0
        %1054 = vmatprep.subr.mxu0 0.0
        %1055 = vmatpush2.msra.mxu0 0.0
        %1056 = vmatprep.subr.mxu0 0.0
        %1057 = vmatpush2.msra.mxu0 0.0
        %1058 = vmatprep.subr.mxu0 0.0
        %1059 = vmatpush2.msra.mxu0 0.0
        %1060 = vmatprep.subr.mxu0 0.0
        %1061 = vmatpush2.msra.mxu0 0.0
        %1062 = vmatprep.subr.mxu0 0.0
        %1063 = vmatpush2.msra.mxu0 0.0
        %1064 = vmatprep.subr.mxu0 0.0
        %1065 = vmatpush2.msra.mxu0 0.0
        %1066 = vmatprep.subr.mxu0 0.0
        %1067 = vmatpush2.msra.mxu0 0.0
        %1068 = vmatprep.subr.mxu0 0.0
        %1069 = vmatpush2.msra.mxu0 0.0
        %1070 = vmatprep.subr.mxu0 0.0
        %1071 = vmatpush2.msra.mxu0 0.0
        %1072 = vmatprep.subr.mxu0 0.0
        %1073 = vmatpush2.msra.mxu0 0.0
        %1074 = vmatprep.subr.mxu0 0.0
        %1075 = vmatpush2.msra.mxu0 0.0
        %1076 = vmatprep.subr.mxu0 0.0
        %1077 = vmatpush2.msra.mxu0 0.0
        %1078 = vmatprep.mubr.f32.mxu0 0.0
        %v1079 = vand.u32 %v882, 4294901760
        %1080 = vmatmul.mubr.f32.gmra.mxu0 %v1079
        %v1081 = vpop.f32.mrf.mxu0
        %v1082 = vadd.f32 %v967, %v1081
        %v1083 = vpop.f32.mrf.mxu0
        %v1084 = vadd.f32 %v969, %v1083
        %1085 = vmatprep.mubr.f32.mxu0 0.0
        %v1086 = vand.u32 %v885, 4294901760
        %1087 = vmatmul.mubr.f32.gmra.mxu0 %v1086
        %v1088 = vpop.f32.mrf.mxu0
        %v1089 = vadd.f32 %v978, %v1088
        %v1090 = vpop.f32.mrf.mxu0
        %v1091 = vadd.f32 %v980, %v1090
        %1092 = vmatprep.mubr.f32.mxu0 0.0
        %v1093 = vand.u32 %v888, 4294901760
        %1094 = vmatmul.mubr.f32.gmra.mxu0 %v1093
        %v1095 = vpop.f32.mrf.mxu0
        %v1096 = vadd.f32 %v989, %v1095
        %v1097 = vpop.f32.mrf.mxu0
        %v1098 = vadd.f32 %v991, %v1097
        %1099 = vmatprep.mubr.f32.mxu0 0.0
        %v1100 = vand.u32 %v891, 4294901760
        %1101 = vmatmul.mubr.f32.gmra.mxu0 %v1100
        %v1102 = vpop.f32.mrf.mxu0
        %v1103 = vadd.f32 %v1000, %v1102
        %v1104 = vpop.f32.mrf.mxu0
        %v1105 = vadd.f32 %v1002, %v1104
        %1106 = vdwg.mxu0
        %1107 = vmatprep.subr.mxu0 0.0
        %1108 = vmatpush1.msra.mxu0 0.0
        %1109 = vmatprep.subr.mxu0 0.0
        %1110 = vmatpush1.msra.mxu0 0.0
        %1111 = vmatprep.subr.mxu0 0.0
        %1112 = vmatpush1.msra.mxu0 0.0
        %1113 = vmatprep.subr.mxu0 0.0
        %1114 = vmatpush1.msra.mxu0 0.0
        %1115 = vmatprep.subr.mxu0 0.0
        %1116 = vmatpush1.msra.mxu0 0.0
        %1117 = vmatprep.subr.mxu0 0.0
        %1118 = vmatpush1.msra.mxu0 0.0
        %1119 = vmatprep.subr.mxu0 0.0
        %1120 = vmatpush1.msra.mxu0 0.0
        %1121 = vmatprep.subr.mxu0 0.0
        %1122 = vmatpush1.msra.mxu0 0.0
        %1123 = vmatprep.subr.mxu0 0.0
        %1124 = vmatpush1.msra.mxu0 0.0
        %1125 = vmatprep.subr.mxu0 0.0
        %1126 = vmatpush1.msra.mxu0 0.0
        %1127 = vmatprep.subr.mxu0 0.0
        %1128 = vmatpush1.msra.mxu0 0.0
        %1129 = vmatprep.subr.mxu0 0.0
        %1130 = vmatpush1.msra.mxu0 0.0
        %1131 = vmatprep.subr.mxu0 0.0
        %1132 = vmatpush1.msra.mxu0 0.0
        %1133 = vmatprep.subr.mxu0 0.0
        %1134 = vmatpush1.msra.mxu0 0.0
        %1135 = vmatprep.subr.mxu0 0.0
        %1136 = vmatpush1.msra.mxu0 0.0
        %v1137 = vand.u32 %v211, 4294901760
        %v1138 = vsub.f32 %v211, %v1137
        %1139 = vmatprep.subr.mxu0 %v1138
        %v1140 = vand.u32 %v210, 4294901760
        %v1141 = vsub.f32 %v210, %v1140
        %1142 = vmatpush1.msra.mxu0 %v1141
        %1143 = vmatprep.subr.mxu0 0.0
        %1144 = vmatpush2.msra.mxu0 0.0
        %1145 = vmatprep.subr.mxu0 0.0
        %1146 = vmatpush2.msra.mxu0 0.0
        %1147 = vmatprep.subr.mxu0 0.0
        %1148 = vmatpush2.msra.mxu0 0.0
        %1149 = vmatprep.subr.mxu0 0.0
        %1150 = vmatpush2.msra.mxu0 0.0
        %1151 = vmatprep.subr.mxu0 0.0
        %1152 = vmatpush2.msra.mxu0 0.0
        %1153 = vmatprep.subr.mxu0 0.0
        %1154 = vmatpush2.msra.mxu0 0.0
        %1155 = vmatprep.subr.mxu0 0.0
        %1156 = vmatpush2.msra.mxu0 0.0
        %1157 = vmatprep.subr.mxu0 0.0
        %1158 = vmatpush2.msra.mxu0 0.0
        %1159 = vmatprep.subr.mxu0 0.0
        %1160 = vmatpush2.msra.mxu0 0.0
        %1161 = vmatprep.subr.mxu0 0.0
        %1162 = vmatpush2.msra.mxu0 0.0
        %1163 = vmatprep.subr.mxu0 0.0
        %1164 = vmatpush2.msra.mxu0 0.0
        %1165 = vmatprep.subr.mxu0 0.0
        %1166 = vmatpush2.msra.mxu0 0.0
        %1167 = vmatprep.subr.mxu0 0.0
        %1168 = vmatpush2.msra.mxu0 0.0
        %1169 = vmatprep.subr.mxu0 0.0
        %1170 = vmatpush2.msra.mxu0 0.0
        %1171 = vmatprep.subr.mxu0 0.0
        %1172 = vmatpush2.msra.mxu0 0.0
        %1173 = vmatprep.subr.mxu0 0.0
        %1174 = vmatpush2.msra.mxu0 0.0
        %1175 = vmatprep.mubr.f32.mxu0 0.0
        %v1176 = vand.u32 %v882, 4294901760
        %v1177 = vsub.f32 %v882, %v1176
        %1178 = vmatmul.mubr.f32.gmra.mxu0 %v1177
        %v1179 = vpop.f32.mrf.mxu0
        %v1180 = vadd.f32 %v1082, %v1179
        %v1181 = vpop.f32.mrf.mxu0
        %v1182 = vadd.f32 %v1084, %v1181
        %1183 = vmatprep.mubr.f32.mxu0 0.0
        %v1184 = vand.u32 %v885, 4294901760
        %v1185 = vsub.f32 %v885, %v1184
        %1186 = vmatmul.mubr.f32.gmra.mxu0 %v1185
        %v1187 = vpop.f32.mrf.mxu0
        %v1188 = vadd.f32 %v1089, %v1187
        %v1189 = vpop.f32.mrf.mxu0
        %v1190 = vadd.f32 %v1091, %v1189
        %1191 = vmatprep.mubr.f32.mxu0 0.0
        %v1192 = vand.u32 %v888, 4294901760
        %v1193 = vsub.f32 %v888, %v1192
        %1194 = vmatmul.mubr.f32.gmra.mxu0 %v1193
        %v1195 = vpop.f32.mrf.mxu0
        %v1196 = vadd.f32 %v1096, %v1195
        %v1197 = vpop.f32.mrf.mxu0
        %v1198 = vadd.f32 %v1098, %v1197
        %1199 = vmatprep.mubr.f32.mxu0 0.0
        %v1200 = vand.u32 %v891, 4294901760
        %v1201 = vsub.f32 %v891, %v1200
        %1202 = vmatmul.mubr.f32.gmra.mxu0 %v1201
        %v1203 = vpop.f32.mrf.mxu0
        %v1204 = vadd.f32 %v1103, %v1203
        %v1205 = vpop.f32.mrf.mxu0
        %v1206 = vadd.f32 %v1105, %v1205
        %1207 = vdwg.mxu0
        %1208 = vmatprep.subr.mxu0 0.0
        %1209 = vmatpush1.msra.mxu0 0.0
        %1210 = vmatprep.subr.mxu0 0.0
        %1211 = vmatpush1.msra.mxu0 0.0
        %1212 = vmatprep.subr.mxu0 0.0
        %1213 = vmatpush1.msra.mxu0 0.0
        %1214 = vmatprep.subr.mxu0 0.0
        %1215 = vmatpush1.msra.mxu0 0.0
        %1216 = vmatprep.subr.mxu0 0.0
        %1217 = vmatpush1.msra.mxu0 0.0
        %1218 = vmatprep.subr.mxu0 0.0
        %1219 = vmatpush1.msra.mxu0 0.0
        %1220 = vmatprep.subr.mxu0 0.0
        %1221 = vmatpush1.msra.mxu0 0.0
        %1222 = vmatprep.subr.mxu0 0.0
        %1223 = vmatpush1.msra.mxu0 0.0
        %1224 = vmatprep.subr.mxu0 0.0
        %1225 = vmatpush1.msra.mxu0 0.0
        %1226 = vmatprep.subr.mxu0 0.0
        %1227 = vmatpush1.msra.mxu0 0.0
        %1228 = vmatprep.subr.mxu0 0.0
        %1229 = vmatpush1.msra.mxu0 0.0
        %1230 = vmatprep.subr.mxu0 0.0
        %1231 = vmatpush1.msra.mxu0 0.0
        %1232 = vmatprep.subr.mxu0 0.0
        %1233 = vmatpush1.msra.mxu0 0.0
        %1234 = vmatprep.subr.mxu0 0.0
        %1235 = vmatpush1.msra.mxu0 0.0
        %1236 = vmatprep.subr.mxu0 0.0
        %1237 = vmatpush1.msra.mxu0 0.0
        %v1238 = vand.u32 %v211, 4294901760
        %1239 = vmatprep.subr.mxu0 %v1238
        %v1240 = vand.u32 %v210, 4294901760
        %1241 = vmatpush1.msra.mxu0 %v1240
        %1242 = vmatprep.subr.mxu0 0.0
        %1243 = vmatpush2.msra.mxu0 0.0
        %1244 = vmatprep.subr.mxu0 0.0
        %1245 = vmatpush2.msra.mxu0 0.0
        %1246 = vmatprep.subr.mxu0 0.0
        %1247 = vmatpush2.msra.mxu0 0.0
        %1248 = vmatprep.subr.mxu0 0.0
        %1249 = vmatpush2.msra.mxu0 0.0
        %1250 = vmatprep.subr.mxu0 0.0
        %1251 = vmatpush2.msra.mxu0 0.0
        %1252 = vmatprep.subr.mxu0 0.0
        %1253 = vmatpush2.msra.mxu0 0.0
        %1254 = vmatprep.subr.mxu0 0.0
        %1255 = vmatpush2.msra.mxu0 0.0
        %1256 = vmatprep.subr.mxu0 0.0
        %1257 = vmatpush2.msra.mxu0 0.0
        %1258 = vmatprep.subr.mxu0 0.0
        %1259 = vmatpush2.msra.mxu0 0.0
        %1260 = vmatprep.subr.mxu0 0.0
        %1261 = vmatpush2.msra.mxu0 0.0
        %1262 = vmatprep.subr.mxu0 0.0
        %1263 = vmatpush2.msra.mxu0 0.0
        %1264 = vmatprep.subr.mxu0 0.0
        %1265 = vmatpush2.msra.mxu0 0.0
        %1266 = vmatprep.subr.mxu0 0.0
        %1267 = vmatpush2.msra.mxu0 0.0
        %1268 = vmatprep.subr.mxu0 0.0
        %1269 = vmatpush2.msra.mxu0 0.0
        %1270 = vmatprep.subr.mxu0 0.0
        %1271 = vmatpush2.msra.mxu0 0.0
        %1272 = vmatprep.subr.mxu0 0.0
        %1273 = vmatpush2.msra.mxu0 0.0
        %1274 = vmatprep.mubr.f32.mxu0 0.0
        %v1275 = vand.u32 %v882, 4294901760
        %v1276 = vsub.f32 %v882, %v1275
        %v1277 = vand.u32 %v1276, 4294901760
        %1278 = vmatmul.mubr.f32.gmra.mxu0 %v1277
        %v1279 = vpop.f32.mrf.mxu0
        %v1280 = vadd.f32 %v1180, %v1279
        %v1281 = vpop.f32.mrf.mxu0
        %v1282 = vadd.f32 %v1182, %v1281
        %1283 = vmatprep.mubr.f32.mxu0 0.0
        %v1284 = vand.u32 %v885, 4294901760
        %v1285 = vsub.f32 %v885, %v1284
        %v1286 = vand.u32 %v1285, 4294901760
        %1287 = vmatmul.mubr.f32.gmra.mxu0 %v1286
        %v1288 = vpop.f32.mrf.mxu0
        %v1289 = vadd.f32 %v1188, %v1288
        %v1290 = vpop.f32.mrf.mxu0
        %v1291 = vadd.f32 %v1190, %v1290
        %1292 = vmatprep.mubr.f32.mxu0 0.0
        %v1293 = vand.u32 %v888, 4294901760
        %v1294 = vsub.f32 %v888, %v1293
        %v1295 = vand.u32 %v1294, 4294901760
        %1296 = vmatmul.mubr.f32.gmra.mxu0 %v1295
        %v1297 = vpop.f32.mrf.mxu0
        %v1298 = vadd.f32 %v1196, %v1297
        %v1299 = vpop.f32.mrf.mxu0
        %v1300 = vadd.f32 %v1198, %v1299
        %1301 = vmatprep.mubr.f32.mxu0 0.0
        %v1302 = vand.u32 %v891, 4294901760
        %v1303 = vsub.f32 %v891, %v1302
        %v1304 = vand.u32 %v1303, 4294901760
        %1305 = vmatmul.mubr.f32.gmra.mxu0 %v1304
        %v1306 = vpop.f32.mrf.mxu0
        %v1307 = vadd.f32 %v1204, %v1306
        %v1308 = vpop.f32.mrf.mxu0
        %v1309 = vadd.f32 %v1206, %v1308
        %1310 = vdwg.mxu0
        %1311 = vmatprep.subr.mxu0 0.0
        %1312 = vmatpush1.msra.mxu0 0.0
        %1313 = vmatprep.subr.mxu0 0.0
        %1314 = vmatpush1.msra.mxu0 0.0
        %1315 = vmatprep.subr.mxu0 0.0
        %1316 = vmatpush1.msra.mxu0 0.0
        %1317 = vmatprep.subr.mxu0 0.0
        %1318 = vmatpush1.msra.mxu0 0.0
        %1319 = vmatprep.subr.mxu0 0.0
        %1320 = vmatpush1.msra.mxu0 0.0
        %1321 = vmatprep.subr.mxu0 0.0
        %1322 = vmatpush1.msra.mxu0 0.0
        %1323 = vmatprep.subr.mxu0 0.0
        %1324 = vmatpush1.msra.mxu0 0.0
        %1325 = vmatprep.subr.mxu0 0.0
        %1326 = vmatpush1.msra.mxu0 0.0
        %1327 = vmatprep.subr.mxu0 0.0
        %1328 = vmatpush1.msra.mxu0 0.0
        %1329 = vmatprep.subr.mxu0 0.0
        %1330 = vmatpush1.msra.mxu0 0.0
        %1331 = vmatprep.subr.mxu0 0.0
        %1332 = vmatpush1.msra.mxu0 0.0
        %1333 = vmatprep.subr.mxu0 0.0
        %1334 = vmatpush1.msra.mxu0 0.0
        %1335 = vmatprep.subr.mxu0 0.0
        %1336 = vmatpush1.msra.mxu0 0.0
        %1337 = vmatprep.subr.mxu0 0.0
        %1338 = vmatpush1.msra.mxu0 0.0
        %1339 = vmatprep.subr.mxu0 0.0
        %1340 = vmatpush1.msra.mxu0 0.0
        %v1341 = vand.u32 %v211, 4294901760
        %v1342 = vsub.f32 %v211, %v1341
        %v1343 = vand.u32 %v1342, 4294901760
        %1344 = vmatprep.subr.mxu0 %v1343
        %v1345 = vand.u32 %v210, 4294901760
        %v1346 = vsub.f32 %v210, %v1345
        %v1347 = vand.u32 %v1346, 4294901760
        %1348 = vmatpush1.msra.mxu0 %v1347
        %1349 = vmatprep.subr.mxu0 0.0
        %1350 = vmatpush2.msra.mxu0 0.0
        %1351 = vmatprep.subr.mxu0 0.0
        %1352 = vmatpush2.msra.mxu0 0.0
        %1353 = vmatprep.subr.mxu0 0.0
        %1354 = vmatpush2.msra.mxu0 0.0
        %1355 = vmatprep.subr.mxu0 0.0
        %1356 = vmatpush2.msra.mxu0 0.0
        %1357 = vmatprep.subr.mxu0 0.0
        %1358 = vmatpush2.msra.mxu0 0.0
        %1359 = vmatprep.subr.mxu0 0.0
        %1360 = vmatpush2.msra.mxu0 0.0
        %1361 = vmatprep.subr.mxu0 0.0
        %1362 = vmatpush2.msra.mxu0 0.0
        %1363 = vmatprep.subr.mxu0 0.0
        %1364 = vmatpush2.msra.mxu0 0.0
        %1365 = vmatprep.subr.mxu0 0.0
        %1366 = vmatpush2.msra.mxu0 0.0
        %1367 = vmatprep.subr.mxu0 0.0
        %1368 = vmatpush2.msra.mxu0 0.0
        %1369 = vmatprep.subr.mxu0 0.0
        %1370 = vmatpush2.msra.mxu0 0.0
        %1371 = vmatprep.subr.mxu0 0.0
        %1372 = vmatpush2.msra.mxu0 0.0
        %1373 = vmatprep.subr.mxu0 0.0
        %1374 = vmatpush2.msra.mxu0 0.0
        %1375 = vmatprep.subr.mxu0 0.0
        %1376 = vmatpush2.msra.mxu0 0.0
        %1377 = vmatprep.subr.mxu0 0.0
        %1378 = vmatpush2.msra.mxu0 0.0
        %1379 = vmatprep.subr.mxu0 0.0
        %1380 = vmatpush2.msra.mxu0 0.0
        %1381 = vmatprep.mubr.f32.mxu0 0.0
        %v1382 = vand.u32 %v882, 4294901760
        %1383 = vmatmul.mubr.f32.gmra.mxu0 %v1382
        %v1384 = vpop.f32.mrf.mxu0
        %v1385 = vadd.f32 %v1280, %v1384
        %v1386 = vpop.f32.mrf.mxu0
        %v1387 = vadd.f32 %v1282, %v1386
        %1388 = vmatprep.mubr.f32.mxu0 0.0
        %v1389 = vand.u32 %v885, 4294901760
        %1390 = vmatmul.mubr.f32.gmra.mxu0 %v1389
        %v1391 = vpop.f32.mrf.mxu0
        %v1392 = vadd.f32 %v1289, %v1391
        %v1393 = vpop.f32.mrf.mxu0
        %v1394 = vadd.f32 %v1291, %v1393
        %1395 = vmatprep.mubr.f32.mxu0 0.0
        %v1396 = vand.u32 %v888, 4294901760
        %1397 = vmatmul.mubr.f32.gmra.mxu0 %v1396
        %v1398 = vpop.f32.mrf.mxu0
        %v1399 = vadd.f32 %v1298, %v1398
        %v1400 = vpop.f32.mrf.mxu0
        %v1401 = vadd.f32 %v1300, %v1400
        %1402 = vmatprep.mubr.f32.mxu0 0.0
        %v1403 = vand.u32 %v891, 4294901760
        %1404 = vmatmul.mubr.f32.gmra.mxu0 %v1403
        %v1405 = vpop.f32.mrf.mxu0
        %v1406 = vadd.f32 %v1307, %v1405
        %v1407 = vpop.f32.mrf.mxu0
        %v1408 = vadd.f32 %v1309, %v1407
        %1409 = vdwg.mxu0
        %1410 = vmatprep.subr.mxu0 0.0
        %1411 = vmatpush1.msra.mxu0 0.0
        %1412 = vmatprep.subr.mxu0 0.0
        %1413 = vmatpush1.msra.mxu0 0.0
        %1414 = vmatprep.subr.mxu0 0.0
        %1415 = vmatpush1.msra.mxu0 0.0
        %1416 = vmatprep.subr.mxu0 0.0
        %1417 = vmatpush1.msra.mxu0 0.0
        %1418 = vmatprep.subr.mxu0 0.0
        %1419 = vmatpush1.msra.mxu0 0.0
        %1420 = vmatprep.subr.mxu0 0.0
        %1421 = vmatpush1.msra.mxu0 0.0
        %1422 = vmatprep.subr.mxu0 0.0
        %1423 = vmatpush1.msra.mxu0 0.0
        %1424 = vmatprep.subr.mxu0 0.0
        %1425 = vmatpush1.msra.mxu0 0.0
        %1426 = vmatprep.subr.mxu0 0.0
        %1427 = vmatpush1.msra.mxu0 0.0
        %1428 = vmatprep.subr.mxu0 0.0
        %1429 = vmatpush1.msra.mxu0 0.0
        %1430 = vmatprep.subr.mxu0 0.0
        %1431 = vmatpush1.msra.mxu0 0.0
        %1432 = vmatprep.subr.mxu0 0.0
        %1433 = vmatpush1.msra.mxu0 0.0
        %1434 = vmatprep.subr.mxu0 0.0
        %1435 = vmatpush1.msra.mxu0 0.0
        %1436 = vmatprep.subr.mxu0 0.0
        %1437 = vmatpush1.msra.mxu0 0.0
        %1438 = vmatprep.subr.mxu0 0.0
        %1439 = vmatpush1.msra.mxu0 0.0
        %v1440 = vand.u32 %v211, 4294901760
        %1441 = vmatprep.subr.mxu0 %v1440
        %v1442 = vand.u32 %v210, 4294901760
        %1443 = vmatpush1.msra.mxu0 %v1442
        %1444 = vmatprep.subr.mxu0 0.0
        %1445 = vmatpush2.msra.mxu0 0.0
        %1446 = vmatprep.subr.mxu0 0.0
        %1447 = vmatpush2.msra.mxu0 0.0
        %1448 = vmatprep.subr.mxu0 0.0
        %1449 = vmatpush2.msra.mxu0 0.0
        %1450 = vmatprep.subr.mxu0 0.0
        %1451 = vmatpush2.msra.mxu0 0.0
        %1452 = vmatprep.subr.mxu0 0.0
        %1453 = vmatpush2.msra.mxu0 0.0
        %1454 = vmatprep.subr.mxu0 0.0
        %1455 = vmatpush2.msra.mxu0 0.0
        %1456 = vmatprep.subr.mxu0 0.0
        %1457 = vmatpush2.msra.mxu0 0.0
        %1458 = vmatprep.subr.mxu0 0.0
        %1459 = vmatpush2.msra.mxu0 0.0
        %1460 = vmatprep.subr.mxu0 0.0
        %1461 = vmatpush2.msra.mxu0 0.0
        %1462 = vmatprep.subr.mxu0 0.0
        %1463 = vmatpush2.msra.mxu0 0.0
        %1464 = vmatprep.subr.mxu0 0.0
        %1465 = vmatpush2.msra.mxu0 0.0
        %1466 = vmatprep.subr.mxu0 0.0
        %1467 = vmatpush2.msra.mxu0 0.0
        %1468 = vmatprep.subr.mxu0 0.0
        %1469 = vmatpush2.msra.mxu0 0.0
        %1470 = vmatprep.subr.mxu0 0.0
        %1471 = vmatpush2.msra.mxu0 0.0
        %1472 = vmatprep.subr.mxu0 0.0
        %1473 = vmatpush2.msra.mxu0 0.0
        %1474 = vmatprep.subr.mxu0 0.0
        %1475 = vmatpush2.msra.mxu0 0.0
        %1476 = vmatprep.mubr.f32.mxu0 0.0
        %v1477 = vand.u32 %v882, 4294901760
        %1478 = vmatmul.mubr.f32.gmra.mxu0 %v1477
        %v1479 = vpop.f32.mrf.mxu0
        %v1480 = vadd.f32 %v1385, %v1479
        %v1481 = vpop.f32.mrf.mxu0
        %v1482 = vadd.f32 %v1387, %v1481
        %1483 = vmatprep.mubr.f32.mxu0 0.0
        %v1484 = vand.u32 %v885, 4294901760
        %1485 = vmatmul.mubr.f32.gmra.mxu0 %v1484
        %v1486 = vpop.f32.mrf.mxu0
        %v1487 = vadd.f32 %v1392, %v1486
        %v1488 = vpop.f32.mrf.mxu0
        %v1489 = vadd.f32 %v1394, %v1488
        %1490 = vmatprep.mubr.f32.mxu0 0.0
        %v1491 = vand.u32 %v888, 4294901760
        %1492 = vmatmul.mubr.f32.gmra.mxu0 %v1491
        %v1493 = vpop.f32.mrf.mxu0
        %v1494 = vadd.f32 %v1399, %v1493
        %v1495 = vpop.f32.mrf.mxu0
        %v1496 = vadd.f32 %v1401, %v1495
        %1497 = vmatprep.mubr.f32.mxu0 0.0
        %v1498 = vand.u32 %v891, 4294901760
        %1499 = vmatmul.mubr.f32.gmra.mxu0 %v1498
        %v1500 = vpop.f32.mrf.mxu0
        %v1501 = vadd.f32 %v1406, %v1500
        %v1502 = vpop.f32.mrf.mxu0
        %v1503 = vadd.f32 %v1408, %v1502
        %1504 = vdwg.mxu0
        %v1506 = vsel %vm256, %v183, 0
        %v1509 = vsel %vm256, %v184, 0
        %v1512 = vsel %vm256, %v185, 0
        %v1515 = vsel %vm256, %v186, 0
        %1517 = vmatprep.subr.mxu0 0.0
        %1518 = vmatpush1.msra.mxu0 0.0
        %1519 = vmatprep.subr.mxu0 0.0
        %1520 = vmatpush1.msra.mxu0 0.0
        %1521 = vmatprep.subr.mxu0 0.0
        %1522 = vmatpush1.msra.mxu0 0.0
        %1523 = vmatprep.subr.mxu0 0.0
        %1524 = vmatpush1.msra.mxu0 0.0
        %1525 = vmatprep.subr.mxu0 0.0
        %1526 = vmatpush1.msra.mxu0 0.0
        %1527 = vmatprep.subr.mxu0 0.0
        %1528 = vmatpush1.msra.mxu0 0.0
        %1529 = vmatprep.subr.mxu0 0.0
        %1530 = vmatpush1.msra.mxu0 0.0
        %1531 = vmatprep.subr.mxu0 0.0
        %1532 = vmatpush1.msra.mxu0 0.0
        %1533 = vmatprep.subr.mxu0 0.0
        %1534 = vmatpush1.msra.mxu0 0.0
        %1535 = vmatprep.subr.mxu0 0.0
        %1536 = vmatpush1.msra.mxu0 0.0
        %1537 = vmatprep.subr.mxu0 0.0
        %1538 = vmatpush1.msra.mxu0 0.0
        %1539 = vmatprep.subr.mxu0 0.0
        %1540 = vmatpush1.msra.mxu0 0.0
        %1541 = vmatprep.subr.mxu0 0.0
        %1542 = vmatpush1.msra.mxu0 0.0
        %1543 = vmatprep.subr.mxu0 0.0
        %1544 = vmatpush1.msra.mxu0 0.0
        %1545 = vmatprep.subr.mxu0 0.0
        %1546 = vmatpush1.msra.mxu0 0.0
        %v1547 = vand.u32 %v255, 4294901760
        %1548 = vmatprep.subr.mxu0 %v1547
        %v1549 = vand.u32 %v254, 4294901760
        %1550 = vmatpush1.msra.mxu0 %v1549
        %1551 = vmatprep.subr.mxu0 0.0
        %1552 = vmatpush2.msra.mxu0 0.0
        %1553 = vmatprep.subr.mxu0 0.0
        %1554 = vmatpush2.msra.mxu0 0.0
        %1555 = vmatprep.subr.mxu0 0.0
        %1556 = vmatpush2.msra.mxu0 0.0
        %1557 = vmatprep.subr.mxu0 0.0
        %1558 = vmatpush2.msra.mxu0 0.0
        %1559 = vmatprep.subr.mxu0 0.0
        %1560 = vmatpush2.msra.mxu0 0.0
        %1561 = vmatprep.subr.mxu0 0.0
        %1562 = vmatpush2.msra.mxu0 0.0
        %1563 = vmatprep.subr.mxu0 0.0
        %1564 = vmatpush2.msra.mxu0 0.0
        %1565 = vmatprep.subr.mxu0 0.0
        %1566 = vmatpush2.msra.mxu0 0.0
        %1567 = vmatprep.subr.mxu0 0.0
        %1568 = vmatpush2.msra.mxu0 0.0
        %1569 = vmatprep.subr.mxu0 0.0
        %1570 = vmatpush2.msra.mxu0 0.0
        %1571 = vmatprep.subr.mxu0 0.0
        %1572 = vmatpush2.msra.mxu0 0.0
        %1573 = vmatprep.subr.mxu0 0.0
        %1574 = vmatpush2.msra.mxu0 0.0
        %1575 = vmatprep.subr.mxu0 0.0
        %1576 = vmatpush2.msra.mxu0 0.0
        %1577 = vmatprep.subr.mxu0 0.0
        %1578 = vmatpush2.msra.mxu0 0.0
        %1579 = vmatprep.subr.mxu0 0.0
        %1580 = vmatpush2.msra.mxu0 0.0
        %1581 = vmatprep.subr.mxu0 0.0
        %1582 = vmatpush2.msra.mxu0 0.0
        %1583 = vmatprep.mubr.f32.mxu0 0.0
        %v1584 = vand.u32 %v1506, 4294901760
        %v1585 = vsub.f32 %v1506, %v1584
        %v1586 = vand.u32 %v1585, 4294901760
        %v1587 = vsub.f32 %v1585, %v1586
        %v1588 = vand.u32 %v1587, 4294901760
        %1589 = vmatmul.mubr.f32.gmra.mxu0 %v1588
        %v1590 = vpop.f32.mrf.mxu0
        %v1591 = vadd.f32 0.0, %v1590
        %v1592 = vpop.f32.mrf.mxu0
        %v1593 = vadd.f32 0.0, %v1592
        %1594 = vmatprep.mubr.f32.mxu0 0.0
        %v1595 = vand.u32 %v1509, 4294901760
        %v1596 = vsub.f32 %v1509, %v1595
        %v1597 = vand.u32 %v1596, 4294901760
        %v1598 = vsub.f32 %v1596, %v1597
        %v1599 = vand.u32 %v1598, 4294901760
        %1600 = vmatmul.mubr.f32.gmra.mxu0 %v1599
        %v1601 = vpop.f32.mrf.mxu0
        %v1602 = vadd.f32 0.0, %v1601
        %v1603 = vpop.f32.mrf.mxu0
        %v1604 = vadd.f32 0.0, %v1603
        %1605 = vmatprep.mubr.f32.mxu0 0.0
        %v1606 = vand.u32 %v1512, 4294901760
        %v1607 = vsub.f32 %v1512, %v1606
        %v1608 = vand.u32 %v1607, 4294901760
        %v1609 = vsub.f32 %v1607, %v1608
        %v1610 = vand.u32 %v1609, 4294901760
        %1611 = vmatmul.mubr.f32.gmra.mxu0 %v1610
        %v1612 = vpop.f32.mrf.mxu0
        %v1613 = vadd.f32 0.0, %v1612
        %v1614 = vpop.f32.mrf.mxu0
        %v1615 = vadd.f32 0.0, %v1614
        %1616 = vmatprep.mubr.f32.mxu0 0.0
        %v1617 = vand.u32 %v1515, 4294901760
        %v1618 = vsub.f32 %v1515, %v1617
        %v1619 = vand.u32 %v1618, 4294901760
        %v1620 = vsub.f32 %v1618, %v1619
        %v1621 = vand.u32 %v1620, 4294901760
        %1622 = vmatmul.mubr.f32.gmra.mxu0 %v1621
        %v1623 = vpop.f32.mrf.mxu0
        %v1624 = vadd.f32 0.0, %v1623
        %v1625 = vpop.f32.mrf.mxu0
        %v1626 = vadd.f32 0.0, %v1625
        %1627 = vdwg.mxu0
        %1628 = vmatprep.subr.mxu0 0.0
        %1629 = vmatpush1.msra.mxu0 0.0
        %1630 = vmatprep.subr.mxu0 0.0
        %1631 = vmatpush1.msra.mxu0 0.0
        %1632 = vmatprep.subr.mxu0 0.0
        %1633 = vmatpush1.msra.mxu0 0.0
        %1634 = vmatprep.subr.mxu0 0.0
        %1635 = vmatpush1.msra.mxu0 0.0
        %1636 = vmatprep.subr.mxu0 0.0
        %1637 = vmatpush1.msra.mxu0 0.0
        %1638 = vmatprep.subr.mxu0 0.0
        %1639 = vmatpush1.msra.mxu0 0.0
        %1640 = vmatprep.subr.mxu0 0.0
        %1641 = vmatpush1.msra.mxu0 0.0
        %1642 = vmatprep.subr.mxu0 0.0
        %1643 = vmatpush1.msra.mxu0 0.0
        %1644 = vmatprep.subr.mxu0 0.0
        %1645 = vmatpush1.msra.mxu0 0.0
        %1646 = vmatprep.subr.mxu0 0.0
        %1647 = vmatpush1.msra.mxu0 0.0
        %1648 = vmatprep.subr.mxu0 0.0
        %1649 = vmatpush1.msra.mxu0 0.0
        %1650 = vmatprep.subr.mxu0 0.0
        %1651 = vmatpush1.msra.mxu0 0.0
        %1652 = vmatprep.subr.mxu0 0.0
        %1653 = vmatpush1.msra.mxu0 0.0
        %1654 = vmatprep.subr.mxu0 0.0
        %1655 = vmatpush1.msra.mxu0 0.0
        %1656 = vmatprep.subr.mxu0 0.0
        %1657 = vmatpush1.msra.mxu0 0.0
        %v1658 = vand.u32 %v255, 4294901760
        %v1659 = vsub.f32 %v255, %v1658
        %v1660 = vand.u32 %v1659, 4294901760
        %v1661 = vsub.f32 %v1659, %v1660
        %v1662 = vand.u32 %v1661, 4294901760
        %1663 = vmatprep.subr.mxu0 %v1662
        %v1664 = vand.u32 %v254, 4294901760
        %v1665 = vsub.f32 %v254, %v1664
        %v1666 = vand.u32 %v1665, 4294901760
        %v1667 = vsub.f32 %v1665, %v1666
        %v1668 = vand.u32 %v1667, 4294901760
        %1669 = vmatpush1.msra.mxu0 %v1668
        %1670 = vmatprep.subr.mxu0 0.0
        %1671 = vmatpush2.msra.mxu0 0.0
        %1672 = vmatprep.subr.mxu0 0.0
        %1673 = vmatpush2.msra.mxu0 0.0
        %1674 = vmatprep.subr.mxu0 0.0
        %1675 = vmatpush2.msra.mxu0 0.0
        %1676 = vmatprep.subr.mxu0 0.0
        %1677 = vmatpush2.msra.mxu0 0.0
        %1678 = vmatprep.subr.mxu0 0.0
        %1679 = vmatpush2.msra.mxu0 0.0
        %1680 = vmatprep.subr.mxu0 0.0
        %1681 = vmatpush2.msra.mxu0 0.0
        %1682 = vmatprep.subr.mxu0 0.0
        %1683 = vmatpush2.msra.mxu0 0.0
        %1684 = vmatprep.subr.mxu0 0.0
        %1685 = vmatpush2.msra.mxu0 0.0
        %1686 = vmatprep.subr.mxu0 0.0
        %1687 = vmatpush2.msra.mxu0 0.0
        %1688 = vmatprep.subr.mxu0 0.0
        %1689 = vmatpush2.msra.mxu0 0.0
        %1690 = vmatprep.subr.mxu0 0.0
        %1691 = vmatpush2.msra.mxu0 0.0
        %1692 = vmatprep.subr.mxu0 0.0
        %1693 = vmatpush2.msra.mxu0 0.0
        %1694 = vmatprep.subr.mxu0 0.0
        %1695 = vmatpush2.msra.mxu0 0.0
        %1696 = vmatprep.subr.mxu0 0.0
        %1697 = vmatpush2.msra.mxu0 0.0
        %1698 = vmatprep.subr.mxu0 0.0
        %1699 = vmatpush2.msra.mxu0 0.0
        %1700 = vmatprep.subr.mxu0 0.0
        %1701 = vmatpush2.msra.mxu0 0.0
        %1702 = vmatprep.mubr.f32.mxu0 0.0
        %v1703 = vand.u32 %v1506, 4294901760
        %1704 = vmatmul.mubr.f32.gmra.mxu0 %v1703
        %v1705 = vpop.f32.mrf.mxu0
        %v1706 = vadd.f32 %v1591, %v1705
        %v1707 = vpop.f32.mrf.mxu0
        %v1708 = vadd.f32 %v1593, %v1707
        %1709 = vmatprep.mubr.f32.mxu0 0.0
        %v1710 = vand.u32 %v1509, 4294901760
        %1711 = vmatmul.mubr.f32.gmra.mxu0 %v1710
        %v1712 = vpop.f32.mrf.mxu0
        %v1713 = vadd.f32 %v1602, %v1712
        %v1714 = vpop.f32.mrf.mxu0
        %v1715 = vadd.f32 %v1604, %v1714
        %1716 = vmatprep.mubr.f32.mxu0 0.0
        %v1717 = vand.u32 %v1512, 4294901760
        %1718 = vmatmul.mubr.f32.gmra.mxu0 %v1717
        %v1719 = vpop.f32.mrf.mxu0
        %v1720 = vadd.f32 %v1613, %v1719
        %v1721 = vpop.f32.mrf.mxu0
        %v1722 = vadd.f32 %v1615, %v1721
        %1723 = vmatprep.mubr.f32.mxu0 0.0
        %v1724 = vand.u32 %v1515, 4294901760
        %1725 = vmatmul.mubr.f32.gmra.mxu0 %v1724
        %v1726 = vpop.f32.mrf.mxu0
        %v1727 = vadd.f32 %v1624, %v1726
        %v1728 = vpop.f32.mrf.mxu0
        %v1729 = vadd.f32 %v1626, %v1728
        %1730 = vdwg.mxu0
        %1731 = vmatprep.subr.mxu0 0.0
        %1732 = vmatpush1.msra.mxu0 0.0
        %1733 = vmatprep.subr.mxu0 0.0
        %1734 = vmatpush1.msra.mxu0 0.0
        %1735 = vmatprep.subr.mxu0 0.0
        %1736 = vmatpush1.msra.mxu0 0.0
        %1737 = vmatprep.subr.mxu0 0.0
        %1738 = vmatpush1.msra.mxu0 0.0
        %1739 = vmatprep.subr.mxu0 0.0
        %1740 = vmatpush1.msra.mxu0 0.0
        %1741 = vmatprep.subr.mxu0 0.0
        %1742 = vmatpush1.msra.mxu0 0.0
        %1743 = vmatprep.subr.mxu0 0.0
        %1744 = vmatpush1.msra.mxu0 0.0
        %1745 = vmatprep.subr.mxu0 0.0
        %1746 = vmatpush1.msra.mxu0 0.0
        %1747 = vmatprep.subr.mxu0 0.0
        %1748 = vmatpush1.msra.mxu0 0.0
        %1749 = vmatprep.subr.mxu0 0.0
        %1750 = vmatpush1.msra.mxu0 0.0
        %1751 = vmatprep.subr.mxu0 0.0
        %1752 = vmatpush1.msra.mxu0 0.0
        %1753 = vmatprep.subr.mxu0 0.0
        %1754 = vmatpush1.msra.mxu0 0.0
        %1755 = vmatprep.subr.mxu0 0.0
        %1756 = vmatpush1.msra.mxu0 0.0
        %1757 = vmatprep.subr.mxu0 0.0
        %1758 = vmatpush1.msra.mxu0 0.0
        %1759 = vmatprep.subr.mxu0 0.0
        %1760 = vmatpush1.msra.mxu0 0.0
        %v1761 = vand.u32 %v255, 4294901760
        %v1762 = vsub.f32 %v255, %v1761
        %1763 = vmatprep.subr.mxu0 %v1762
        %v1764 = vand.u32 %v254, 4294901760
        %v1765 = vsub.f32 %v254, %v1764
        %1766 = vmatpush1.msra.mxu0 %v1765
        %1767 = vmatprep.subr.mxu0 0.0
        %1768 = vmatpush2.msra.mxu0 0.0
        %1769 = vmatprep.subr.mxu0 0.0
        %1770 = vmatpush2.msra.mxu0 0.0
        %1771 = vmatprep.subr.mxu0 0.0
        %1772 = vmatpush2.msra.mxu0 0.0
        %1773 = vmatprep.subr.mxu0 0.0
        %1774 = vmatpush2.msra.mxu0 0.0
        %1775 = vmatprep.subr.mxu0 0.0
        %1776 = vmatpush2.msra.mxu0 0.0
        %1777 = vmatprep.subr.mxu0 0.0
        %1778 = vmatpush2.msra.mxu0 0.0
        %1779 = vmatprep.subr.mxu0 0.0
        %1780 = vmatpush2.msra.mxu0 0.0
        %1781 = vmatprep.subr.mxu0 0.0
        %1782 = vmatpush2.msra.mxu0 0.0
        %1783 = vmatprep.subr.mxu0 0.0
        %1784 = vmatpush2.msra.mxu0 0.0
        %1785 = vmatprep.subr.mxu0 0.0
        %1786 = vmatpush2.msra.mxu0 0.0
        %1787 = vmatprep.subr.mxu0 0.0
        %1788 = vmatpush2.msra.mxu0 0.0
        %1789 = vmatprep.subr.mxu0 0.0
        %1790 = vmatpush2.msra.mxu0 0.0
        %1791 = vmatprep.subr.mxu0 0.0
        %1792 = vmatpush2.msra.mxu0 0.0
        %1793 = vmatprep.subr.mxu0 0.0
        %1794 = vmatpush2.msra.mxu0 0.0
        %1795 = vmatprep.subr.mxu0 0.0
        %1796 = vmatpush2.msra.mxu0 0.0
        %1797 = vmatprep.subr.mxu0 0.0
        %1798 = vmatpush2.msra.mxu0 0.0
        %1799 = vmatprep.mubr.f32.mxu0 0.0
        %v1800 = vand.u32 %v1506, 4294901760
        %v1801 = vsub.f32 %v1506, %v1800
        %1802 = vmatmul.mubr.f32.gmra.mxu0 %v1801
        %v1803 = vpop.f32.mrf.mxu0
        %v1804 = vadd.f32 %v1706, %v1803
        %v1805 = vpop.f32.mrf.mxu0
        %v1806 = vadd.f32 %v1708, %v1805
        %1807 = vmatprep.mubr.f32.mxu0 0.0
        %v1808 = vand.u32 %v1509, 4294901760
        %v1809 = vsub.f32 %v1509, %v1808
        %1810 = vmatmul.mubr.f32.gmra.mxu0 %v1809
        %v1811 = vpop.f32.mrf.mxu0
        %v1812 = vadd.f32 %v1713, %v1811
        %v1813 = vpop.f32.mrf.mxu0
        %v1814 = vadd.f32 %v1715, %v1813
        %1815 = vmatprep.mubr.f32.mxu0 0.0
        %v1816 = vand.u32 %v1512, 4294901760
        %v1817 = vsub.f32 %v1512, %v1816
        %1818 = vmatmul.mubr.f32.gmra.mxu0 %v1817
        %v1819 = vpop.f32.mrf.mxu0
        %v1820 = vadd.f32 %v1720, %v1819
        %v1821 = vpop.f32.mrf.mxu0
        %v1822 = vadd.f32 %v1722, %v1821
        %1823 = vmatprep.mubr.f32.mxu0 0.0
        %v1824 = vand.u32 %v1515, 4294901760
        %v1825 = vsub.f32 %v1515, %v1824
        %1826 = vmatmul.mubr.f32.gmra.mxu0 %v1825
        %v1827 = vpop.f32.mrf.mxu0
        %v1828 = vadd.f32 %v1727, %v1827
        %v1829 = vpop.f32.mrf.mxu0
        %v1830 = vadd.f32 %v1729, %v1829
        %1831 = vdwg.mxu0
        %1832 = vmatprep.subr.mxu0 0.0
        %1833 = vmatpush1.msra.mxu0 0.0
        %1834 = vmatprep.subr.mxu0 0.0
        %1835 = vmatpush1.msra.mxu0 0.0
        %1836 = vmatprep.subr.mxu0 0.0
        %1837 = vmatpush1.msra.mxu0 0.0
        %1838 = vmatprep.subr.mxu0 0.0
        %1839 = vmatpush1.msra.mxu0 0.0
        %1840 = vmatprep.subr.mxu0 0.0
        %1841 = vmatpush1.msra.mxu0 0.0
        %1842 = vmatprep.subr.mxu0 0.0
        %1843 = vmatpush1.msra.mxu0 0.0
        %1844 = vmatprep.subr.mxu0 0.0
        %1845 = vmatpush1.msra.mxu0 0.0
        %1846 = vmatprep.subr.mxu0 0.0
        %1847 = vmatpush1.msra.mxu0 0.0
        %1848 = vmatprep.subr.mxu0 0.0
        %1849 = vmatpush1.msra.mxu0 0.0
        %1850 = vmatprep.subr.mxu0 0.0
        %1851 = vmatpush1.msra.mxu0 0.0
        %1852 = vmatprep.subr.mxu0 0.0
        %1853 = vmatpush1.msra.mxu0 0.0
        %1854 = vmatprep.subr.mxu0 0.0
        %1855 = vmatpush1.msra.mxu0 0.0
        %1856 = vmatprep.subr.mxu0 0.0
        %1857 = vmatpush1.msra.mxu0 0.0
        %1858 = vmatprep.subr.mxu0 0.0
        %1859 = vmatpush1.msra.mxu0 0.0
        %1860 = vmatprep.subr.mxu0 0.0
        %1861 = vmatpush1.msra.mxu0 0.0
        %v1862 = vand.u32 %v255, 4294901760
        %1863 = vmatprep.subr.mxu0 %v1862
        %v1864 = vand.u32 %v254, 4294901760
        %1865 = vmatpush1.msra.mxu0 %v1864
        %1866 = vmatprep.subr.mxu0 0.0
        %1867 = vmatpush2.msra.mxu0 0.0
        %1868 = vmatprep.subr.mxu0 0.0
        %1869 = vmatpush2.msra.mxu0 0.0
        %1870 = vmatprep.subr.mxu0 0.0
        %1871 = vmatpush2.msra.mxu0 0.0
        %1872 = vmatprep.subr.mxu0 0.0
        %1873 = vmatpush2.msra.mxu0 0.0
        %1874 = vmatprep.subr.mxu0 0.0
        %1875 = vmatpush2.msra.mxu0 0.0
        %1876 = vmatprep.subr.mxu0 0.0
        %1877 = vmatpush2.msra.mxu0 0.0
        %1878 = vmatprep.subr.mxu0 0.0
        %1879 = vmatpush2.msra.mxu0 0.0
        %1880 = vmatprep.subr.mxu0 0.0
        %1881 = vmatpush2.msra.mxu0 0.0
        %1882 = vmatprep.subr.mxu0 0.0
        %1883 = vmatpush2.msra.mxu0 0.0
        %1884 = vmatprep.subr.mxu0 0.0
        %1885 = vmatpush2.msra.mxu0 0.0
        %1886 = vmatprep.subr.mxu0 0.0
        %1887 = vmatpush2.msra.mxu0 0.0
        %1888 = vmatprep.subr.mxu0 0.0
        %1889 = vmatpush2.msra.mxu0 0.0
        %1890 = vmatprep.subr.mxu0 0.0
        %1891 = vmatpush2.msra.mxu0 0.0
        %1892 = vmatprep.subr.mxu0 0.0
        %1893 = vmatpush2.msra.mxu0 0.0
        %1894 = vmatprep.subr.mxu0 0.0
        %1895 = vmatpush2.msra.mxu0 0.0
        %1896 = vmatprep.subr.mxu0 0.0
        %1897 = vmatpush2.msra.mxu0 0.0
        %1898 = vmatprep.mubr.f32.mxu0 0.0
        %v1899 = vand.u32 %v1506, 4294901760
        %v1900 = vsub.f32 %v1506, %v1899
        %v1901 = vand.u32 %v1900, 4294901760
        %1902 = vmatmul.mubr.f32.gmra.mxu0 %v1901
        %v1903 = vpop.f32.mrf.mxu0
        %v1904 = vadd.f32 %v1804, %v1903
        %v1905 = vpop.f32.mrf.mxu0
        %v1906 = vadd.f32 %v1806, %v1905
        %1907 = vmatprep.mubr.f32.mxu0 0.0
        %v1908 = vand.u32 %v1509, 4294901760
        %v1909 = vsub.f32 %v1509, %v1908
        %v1910 = vand.u32 %v1909, 4294901760
        %1911 = vmatmul.mubr.f32.gmra.mxu0 %v1910
        %v1912 = vpop.f32.mrf.mxu0
        %v1913 = vadd.f32 %v1812, %v1912
        %v1914 = vpop.f32.mrf.mxu0
        %v1915 = vadd.f32 %v1814, %v1914
        %1916 = vmatprep.mubr.f32.mxu0 0.0
        %v1917 = vand.u32 %v1512, 4294901760
        %v1918 = vsub.f32 %v1512, %v1917
        %v1919 = vand.u32 %v1918, 4294901760
        %1920 = vmatmul.mubr.f32.gmra.mxu0 %v1919
        %v1921 = vpop.f32.mrf.mxu0
        %v1922 = vadd.f32 %v1820, %v1921
        %v1923 = vpop.f32.mrf.mxu0
        %v1924 = vadd.f32 %v1822, %v1923
        %1925 = vmatprep.mubr.f32.mxu0 0.0
        %v1926 = vand.u32 %v1515, 4294901760
        %v1927 = vsub.f32 %v1515, %v1926
        %v1928 = vand.u32 %v1927, 4294901760
        %1929 = vmatmul.mubr.f32.gmra.mxu0 %v1928
        %v1930 = vpop.f32.mrf.mxu0
        %v1931 = vadd.f32 %v1828, %v1930
        %v1932 = vpop.f32.mrf.mxu0
        %v1933 = vadd.f32 %v1830, %v1932
        %1934 = vdwg.mxu0
        %1935 = vmatprep.subr.mxu0 0.0
        %1936 = vmatpush1.msra.mxu0 0.0
        %1937 = vmatprep.subr.mxu0 0.0
        %1938 = vmatpush1.msra.mxu0 0.0
        %1939 = vmatprep.subr.mxu0 0.0
        %1940 = vmatpush1.msra.mxu0 0.0
        %1941 = vmatprep.subr.mxu0 0.0
        %1942 = vmatpush1.msra.mxu0 0.0
        %1943 = vmatprep.subr.mxu0 0.0
        %1944 = vmatpush1.msra.mxu0 0.0
        %1945 = vmatprep.subr.mxu0 0.0
        %1946 = vmatpush1.msra.mxu0 0.0
        %1947 = vmatprep.subr.mxu0 0.0
        %1948 = vmatpush1.msra.mxu0 0.0
        %1949 = vmatprep.subr.mxu0 0.0
        %1950 = vmatpush1.msra.mxu0 0.0
        %1951 = vmatprep.subr.mxu0 0.0
        %1952 = vmatpush1.msra.mxu0 0.0
        %1953 = vmatprep.subr.mxu0 0.0
        %1954 = vmatpush1.msra.mxu0 0.0
        %1955 = vmatprep.subr.mxu0 0.0
        %1956 = vmatpush1.msra.mxu0 0.0
        %1957 = vmatprep.subr.mxu0 0.0
        %1958 = vmatpush1.msra.mxu0 0.0
        %1959 = vmatprep.subr.mxu0 0.0
        %1960 = vmatpush1.msra.mxu0 0.0
        %1961 = vmatprep.subr.mxu0 0.0
        %1962 = vmatpush1.msra.mxu0 0.0
        %1963 = vmatprep.subr.mxu0 0.0
        %1964 = vmatpush1.msra.mxu0 0.0
        %v1965 = vand.u32 %v255, 4294901760
        %v1966 = vsub.f32 %v255, %v1965
        %v1967 = vand.u32 %v1966, 4294901760
        %1968 = vmatprep.subr.mxu0 %v1967
        %v1969 = vand.u32 %v254, 4294901760
        %v1970 = vsub.f32 %v254, %v1969
        %v1971 = vand.u32 %v1970, 4294901760
        %1972 = vmatpush1.msra.mxu0 %v1971
        %1973 = vmatprep.subr.mxu0 0.0
        %1974 = vmatpush2.msra.mxu0 0.0
        %1975 = vmatprep.subr.mxu0 0.0
        %1976 = vmatpush2.msra.mxu0 0.0
        %1977 = vmatprep.subr.mxu0 0.0
        %1978 = vmatpush2.msra.mxu0 0.0
        %1979 = vmatprep.subr.mxu0 0.0
        %1980 = vmatpush2.msra.mxu0 0.0
        %1981 = vmatprep.subr.mxu0 0.0
        %1982 = vmatpush2.msra.mxu0 0.0
        %1983 = vmatprep.subr.mxu0 0.0
        %1984 = vmatpush2.msra.mxu0 0.0
        %1985 = vmatprep.subr.mxu0 0.0
        %1986 = vmatpush2.msra.mxu0 0.0
        %1987 = vmatprep.subr.mxu0 0.0
        %1988 = vmatpush2.msra.mxu0 0.0
        %1989 = vmatprep.subr.mxu0 0.0
        %1990 = vmatpush2.msra.mxu0 0.0
        %1991 = vmatprep.subr.mxu0 0.0
        %1992 = vmatpush2.msra.mxu0 0.0
        %1993 = vmatprep.subr.mxu0 0.0
        %1994 = vmatpush2.msra.mxu0 0.0
        %1995 = vmatprep.subr.mxu0 0.0
        %1996 = vmatpush2.msra.mxu0 0.0
        %1997 = vmatprep.subr.mxu0 0.0
        %1998 = vmatpush2.msra.mxu0 0.0
        %1999 = vmatprep.subr.mxu0 0.0
        %2000 = vmatpush2.msra.mxu0 0.0
        %2001 = vmatprep.subr.mxu0 0.0
        %2002 = vmatpush2.msra.mxu0 0.0
        %2003 = vmatprep.subr.mxu0 0.0
        %2004 = vmatpush2.msra.mxu0 0.0
        %2005 = vmatprep.mubr.f32.mxu0 0.0
        %v2006 = vand.u32 %v1506, 4294901760
        %2007 = vmatmul.mubr.f32.gmra.mxu0 %v2006
        %v2008 = vpop.f32.mrf.mxu0
        %v2009 = vadd.f32 %v1904, %v2008
        %v2010 = vpop.f32.mrf.mxu0
        %v2011 = vadd.f32 %v1906, %v2010
        %2012 = vmatprep.mubr.f32.mxu0 0.0
        %v2013 = vand.u32 %v1509, 4294901760
        %2014 = vmatmul.mubr.f32.gmra.mxu0 %v2013
        %v2015 = vpop.f32.mrf.mxu0
        %v2016 = vadd.f32 %v1913, %v2015
        %v2017 = vpop.f32.mrf.mxu0
        %v2018 = vadd.f32 %v1915, %v2017
        %2019 = vmatprep.mubr.f32.mxu0 0.0
        %v2020 = vand.u32 %v1512, 4294901760
        %2021 = vmatmul.mubr.f32.gmra.mxu0 %v2020
        %v2022 = vpop.f32.mrf.mxu0
        %v2023 = vadd.f32 %v1922, %v2022
        %v2024 = vpop.f32.mrf.mxu0
        %v2025 = vadd.f32 %v1924, %v2024
        %2026 = vmatprep.mubr.f32.mxu0 0.0
        %v2027 = vand.u32 %v1515, 4294901760
        %2028 = vmatmul.mubr.f32.gmra.mxu0 %v2027
        %v2029 = vpop.f32.mrf.mxu0
        %v2030 = vadd.f32 %v1931, %v2029
        %v2031 = vpop.f32.mrf.mxu0
        %v2032 = vadd.f32 %v1933, %v2031
        %2033 = vdwg.mxu0
        %2034 = vmatprep.subr.mxu0 0.0
        %2035 = vmatpush1.msra.mxu0 0.0
        %2036 = vmatprep.subr.mxu0 0.0
        %2037 = vmatpush1.msra.mxu0 0.0
        %2038 = vmatprep.subr.mxu0 0.0
        %2039 = vmatpush1.msra.mxu0 0.0
        %2040 = vmatprep.subr.mxu0 0.0
        %2041 = vmatpush1.msra.mxu0 0.0
        %2042 = vmatprep.subr.mxu0 0.0
        %2043 = vmatpush1.msra.mxu0 0.0
        %2044 = vmatprep.subr.mxu0 0.0
        %2045 = vmatpush1.msra.mxu0 0.0
        %2046 = vmatprep.subr.mxu0 0.0
        %2047 = vmatpush1.msra.mxu0 0.0
        %2048 = vmatprep.subr.mxu0 0.0
        %2049 = vmatpush1.msra.mxu0 0.0
        %2050 = vmatprep.subr.mxu0 0.0
        %2051 = vmatpush1.msra.mxu0 0.0
        %2052 = vmatprep.subr.mxu0 0.0
        %2053 = vmatpush1.msra.mxu0 0.0
        %2054 = vmatprep.subr.mxu0 0.0
        %2055 = vmatpush1.msra.mxu0 0.0
        %2056 = vmatprep.subr.mxu0 0.0
        %2057 = vmatpush1.msra.mxu0 0.0
        %2058 = vmatprep.subr.mxu0 0.0
        %2059 = vmatpush1.msra.mxu0 0.0
        %2060 = vmatprep.subr.mxu0 0.0
        %2061 = vmatpush1.msra.mxu0 0.0
        %2062 = vmatprep.subr.mxu0 0.0
        %2063 = vmatpush1.msra.mxu0 0.0
        %v2064 = vand.u32 %v255, 4294901760
        %2065 = vmatprep.subr.mxu0 %v2064
        %v2066 = vand.u32 %v254, 4294901760
        %2067 = vmatpush1.msra.mxu0 %v2066
        %2068 = vmatprep.subr.mxu0 0.0
        %2069 = vmatpush2.msra.mxu0 0.0
        %2070 = vmatprep.subr.mxu0 0.0
        %2071 = vmatpush2.msra.mxu0 0.0
        %2072 = vmatprep.subr.mxu0 0.0
        %2073 = vmatpush2.msra.mxu0 0.0
        %2074 = vmatprep.subr.mxu0 0.0
        %2075 = vmatpush2.msra.mxu0 0.0
        %2076 = vmatprep.subr.mxu0 0.0
        %2077 = vmatpush2.msra.mxu0 0.0
        %2078 = vmatprep.subr.mxu0 0.0
        %2079 = vmatpush2.msra.mxu0 0.0
        %2080 = vmatprep.subr.mxu0 0.0
        %2081 = vmatpush2.msra.mxu0 0.0
        %2082 = vmatprep.subr.mxu0 0.0
        %2083 = vmatpush2.msra.mxu0 0.0
        %2084 = vmatprep.subr.mxu0 0.0
        %2085 = vmatpush2.msra.mxu0 0.0
        %2086 = vmatprep.subr.mxu0 0.0
        %2087 = vmatpush2.msra.mxu0 0.0
        %2088 = vmatprep.subr.mxu0 0.0
        %2089 = vmatpush2.msra.mxu0 0.0
        %2090 = vmatprep.subr.mxu0 0.0
        %2091 = vmatpush2.msra.mxu0 0.0
        %2092 = vmatprep.subr.mxu0 0.0
        %2093 = vmatpush2.msra.mxu0 0.0
        %2094 = vmatprep.subr.mxu0 0.0
        %2095 = vmatpush2.msra.mxu0 0.0
        %2096 = vmatprep.subr.mxu0 0.0
        %2097 = vmatpush2.msra.mxu0 0.0
        %2098 = vmatprep.subr.mxu0 0.0
        %2099 = vmatpush2.msra.mxu0 0.0
        %2100 = vmatprep.mubr.f32.mxu0 0.0
        %v2101 = vand.u32 %v1506, 4294901760
        %2102 = vmatmul.mubr.f32.gmra.mxu0 %v2101
        %v2103 = vpop.f32.mrf.mxu0
        %v2104 = vadd.f32 %v2009, %v2103
        %v2105 = vpop.f32.mrf.mxu0
        %v2106 = vadd.f32 %v2011, %v2105
        %2107 = vmatprep.mubr.f32.mxu0 0.0
        %v2108 = vand.u32 %v1509, 4294901760
        %2109 = vmatmul.mubr.f32.gmra.mxu0 %v2108
        %v2110 = vpop.f32.mrf.mxu0
        %v2111 = vadd.f32 %v2016, %v2110
        %v2112 = vpop.f32.mrf.mxu0
        %v2113 = vadd.f32 %v2018, %v2112
        %2114 = vmatprep.mubr.f32.mxu0 0.0
        %v2115 = vand.u32 %v1512, 4294901760
        %2116 = vmatmul.mubr.f32.gmra.mxu0 %v2115
        %v2117 = vpop.f32.mrf.mxu0
        %v2118 = vadd.f32 %v2023, %v2117
        %v2119 = vpop.f32.mrf.mxu0
        %v2120 = vadd.f32 %v2025, %v2119
        %2121 = vmatprep.mubr.f32.mxu0 0.0
        %v2122 = vand.u32 %v1515, 4294901760
        %2123 = vmatmul.mubr.f32.gmra.mxu0 %v2122
        %v2124 = vpop.f32.mrf.mxu0
        %v2125 = vadd.f32 %v2030, %v2124
        %v2126 = vpop.f32.mrf.mxu0
        %v2127 = vadd.f32 %v2032, %v2126
        %2128 = vdwg.mxu0
        %v2129 = vadd.f32 %v1480, %v2104
        %v2130 = vadd.f32 %v1482, %v2106
        %v2131 = vadd.f32 %v1487, %v2111
        %v2132 = vadd.f32 %v1489, %v2113
        %v2133 = vadd.f32 %v1494, %v2118
        %v2134 = vadd.f32 %v1496, %v2120
        %v2135 = vadd.f32 %v1501, %v2125
        %v2136 = vadd.f32 %v1503, %v2127
        %2137 = vst [vmem:[%s161] sm:$0xff] %v2129
        %2138 = vst [vmem:[%s161 + $0x8] sm:$0xff] %v2130
        %2139 = vst [vmem:[%s161 + $0x10] sm:$0xff] %v2131
        %2140 = vst [vmem:[%s161 + $0x18] sm:$0xff] %v2132
        %2141 = vst [vmem:[%s161 + $0x20] sm:$0xff] %v2133
        %2142 = vst [vmem:[%s161 + $0x28] sm:$0xff] %v2134
        %2143 = vst [vmem:[%s161 + $0x30] sm:$0xff] %v2135
        %2144 = vst [vmem:[%s161 + $0x38] sm:$0xff] %v2136
        %s2145 = sand.u32 %s87, 1
        %s2146 = scalar_lea.sflag [#allocation3], %s2145
        %s2147 = sand.u32 %s87, 1
        %s2148 = smul.addr %s2147, 64
        %s2149 = scalar_lea.vmem [#allocation2], %s2148
        // Predicated region
        $region29: #{tpu_custom_call.1} parent=27 // pred_check
          %p2150 = pneg %p97
        $region30: #{tpu_custom_call.1} parent=27 // pred_check_branch
          %2152 = sbr.rel (%p2150) target = $region32
        $region31: #{tpu_custom_call.1} parent=27 // pred_region
          %s2153 = smul.u32 2, %s21
          %s2155 = ssub.s32 1024, 1024
          %2156 = vsyncadd %s2146, %s2155
          %s2157 = smul.addr %s20, 8
          %s2158 = sadd.s32 %s2153, %s2157
          %s2159 = smul.addr %s2158, 128
          %s2160 = scalar_lea.hbm %s2, %s2159
          %s2161 = sshll.u32 %s2149, 4
          %s2162 = int_to_ptr.vmem [resolvable:$true] %s2161
          %2167 = dma.vmem_to_hbm [thread:$0]  %s2162, 1024, %s2160, %s2146, 256, 256, 16
        $region32: #{tpu_custom_call.1} parent=27 // pred_fallthru
          _
      $region28: #{tpu_custom_call.1} parent=5 // pred_fallthru
        _
      %p2168 = scmp.le.s32.totalorder 2, %s11
      // Predicated region
      $region33: #{tpu_custom_call.1} parent=5 // pred_check
        %p2169 = pneg %p2168
      $region34: #{tpu_custom_call.1} parent=5 // pred_check_branch
        %2171 = sbr.rel (%p2169) target = $region36
      $region35: #{tpu_custom_call.1} parent=5 // pred_region
        %s2172 = ssub.s32 %s11, 2
        // Predicated region
        $region37: #{tpu_custom_call.1} parent=35 // pred_check
          %p2173 = pneg %p103
        $region38: #{tpu_custom_call.1} parent=35 // pred_check_branch
          %2175 = sbr.rel (%p2173) target = $region40
        $region39: #{tpu_custom_call.1} parent=35 // pred_region
          %s2176 = sand.u32 %s88, 1
          %s2177 = scalar_lea.sflag [#allocation3], %s2176
          %s2178 = sand.u32 %s88, 1
          %s2179 = smul.addr %s2178, 64
          %s2180 = scalar_lea.vmem [#allocation2], %s2179
          %2181 = dma.done %s2177, 1024
        $region40: #{tpu_custom_call.1} parent=35 // pred_fallthru
          _
      $region36: #{tpu_custom_call.1} parent=5 // pred_fallthru
        _
    $region6: #{tpu_custom_call.1} parent=1 // loop_footer
      %s15 = sadd.s32 1, %s11
    $region7: #{tpu_custom_call.1} parent=1 // loop_footer_branch
      %10 = sbr.rel target = $region3
    $region8: #{tpu_custom_call.1} parent=1 // loop_exit
      _
    %2182 = vsyncpa [#allocation3], 1
    %s2183 = scalar_lea.sflag [#allocation3], 1
    %2184 = vsyncpa %s2183, 1

</llo_original>
